<compile_context>
chip_gen: v6e
topology: v6e:2x2x1
jax: 0.10.0
libtpu: 0.0.40
codegen_flags: <defaults>
</compile_context>

<pallas_src>
import jax
import jax.numpy as jnp
from jax import lax
from jax.experimental import pallas as pl
from jax.experimental.pallas import tpu as pltpu


# ----------------------------------------------------------------------------- kernel


def bigru_dir_kernel(x_ref, wi_ref, bx_ref, wh_ref, bhn_ref, out_ref, hid_ref, gx_ref):
    """One GRU direction per grid point (d=0 forward, d=1 backward).

    x_ref  : (T, Bp, E)        shared embedded input (batch padded to 8 sublanes)
    wi_ref : (E, 3*HP)         fused input weights for this direction (r|z|n blocks)
    bx_ref : (1, 3*HP)         pre-folded input-side (+ r/z hidden) biases
    wh_ref : (HP, 3*HP)        fused recurrent weights
    bhn_ref: (1, HP)           n-gate hidden bias (must stay inside r*(...))
    out_ref: (T, Bp, HP)       this direction's per-step hidden states
    hid_ref: (Bp, HP)          this direction's final hidden state
    gx_ref : (T, Bp, 3*HP)     VMEM scratch for the hoisted input projections
    """
    d = pl.program_id(0)
    T, Bp, E = x_ref.shape
    HP = hid_ref.shape[-1]

    # ---- Hoisted input projections: one MXU GEMM for all 3 gates, off the serial chain.
    gx = jnp.dot(x_ref[...].reshape(T * Bp, E), wi_ref[...],
                 preferred_element_type=jnp.float32)          # (T*Bp, 3HP)
    gx_ref[...] = gx.reshape(T, Bp, 3 * HP) + bx_ref[...]

    w_h = wh_ref[...]                                         # (HP, 3HP)
    b_hn = bhn_ref[...]                                       # (1, HP)

    def body(t, h_prev):
        # d == 0: walk t forward; d == 1: walk t backward.  Both do a dense per-step
        # store to their own output slab (lane-dense: last dim HP is a 128 multiple).
        t_idx = jnp.where(d == 0, t, T - 1 - t)
        gx_t = gx_ref[t_idx]                                  # (Bp, 3HP), leading-axis read
        gh = jnp.dot(h_prev, w_h, preferred_element_type=jnp.float32)   # (Bp, 3HP)
        r = jax.nn.sigmoid(gx_t[:, :HP] + gh[:, :HP])
        z = jax.nn.sigmoid(gx_t[:, HP:2 * HP] + gh[:, HP:2 * HP])
        n = jnp.tanh(gx_t[:, 2 * HP:] + r * (gh[:, 2 * HP:] + b_hn))
        h_new = (1.0 - z) * n + z * h_prev
        out_ref[t_idx] = h_new
        return h_new

    h_last = lax.fori_loop(0, T, body, jnp.zeros((Bp, HP), jnp.float32), unroll=True)
    hid_ref[...] = h_last


# ----------------------------------------------------------------------------- params


def init_params(key, input_size, embed_size, hidden_size):
    """Deterministic synthetic parameters (shapes match nn.Embedding + bidirectional nn.GRU)."""
    ks = jax.random.split(key, 9)
    k = 1.0 / jnp.sqrt(hidden_size)

    def uni(kk, shape):
        return jax.random.uniform(kk, shape, jnp.float32, minval=-k, maxval=k)

    return {
        "embed": jax.random.normal(ks[0], (input_size, embed_size), jnp.float32),
        # gate order (r, z, n); weights stored transposed per gate: (3, in, H)
        "wih_f": uni(ks[1], (3, embed_size, hidden_size)),
        "whh_f": uni(ks[2], (3, hidden_size, hidden_size)),
        "bih_f": uni(ks[3], (3, 1, hidden_size)),
        "bhh_f": uni(ks[4], (3, 1, hidden_size)),
        "wih_r": uni(ks[5], (3, embed_size, hidden_size)),
        "whh_r": uni(ks[6], (3, hidden_size, hidden_size)),
        "bih_r": uni(ks[7], (3, 1, hidden_size)),
        "bhh_r": uni(ks[8], (3, 1, hidden_size)),
    }


def _fuse_direction(wih, whh, bih, bhh, hp):
    """Lane-pad each gate's H to `hp` and fuse (r, z, n) into wide, lane-tile-aligned blocks.

    Zero-padding the weight/bias columns keeps the padded lanes of the hidden state at
    exactly 0 for all timesteps, so real lanes match the unpadded math bit-for-bit.
    """
    _, E, H = wih.shape
    ph = hp - H

    def pad_last(a):
        return jnp.pad(a, [(0, 0)] * (a.ndim - 1) + [(0, ph)])

    wih_p = pad_last(wih)                                       # (3, E, HP)
    whh_p = jnp.pad(whh, [(0, 0), (0, ph), (0, ph)])            # (3, HP, HP) zero rows+cols
    bih_p = pad_last(bih)                                       # (3, 1, HP)
    bhh_p = pad_last(bhh)                                       # (3, 1, HP)

    w_i = jnp.transpose(wih_p, (1, 0, 2)).reshape(E, 3 * hp)    # (E, 3HP), gate blocks r|z|n
    w_h = jnp.transpose(whh_p, (1, 0, 2)).reshape(hp, 3 * hp)   # (HP, 3HP)
    # r, z gates: input and hidden biases just add -> pre-fold them together.
    # n gate: only the input bias can be folded; b_hn must stay inside r*(h@W_hn + b_hn).
    b_x = jnp.concatenate([bih_p[0] + bhh_p[0], bih_p[1] + bhh_p[1], bih_p[2]], axis=-1)
    b_hn = bhh_p[2]                                             # (1, HP)
    return w_i, w_h, b_x, b_hn


# ----------------------------------------------------------------------------- wrapper


def encoder_forward(src, params):
    T, B = src.shape
    E = params["embed"].shape[1]
    H = params["whh_f"].shape[-1]
    Bp = ((B + 7) // 8) * 8            # pad batch to sublane width
    HP = ((H + 127) // 128) * 128      # pad hidden to lane-tile width (gate blocks aligned)

    # Embedding lookup is a gather (glue) kept in plain JAX; pad batch rows with zeros.
    x = jnp.take(params["embed"], src, axis=0)                  # (T, B, E)
    x = jnp.pad(x, ((0, 0), (0, Bp - B), (0, 0)))               # (T, Bp, E)

    wi_f, wh_f, bx_f, bhn_f = _fuse_direction(params["wih_f"], params["whh_f"],
                                              params["bih_f"], params["bhh_f"], HP)
    wi_r, wh_r, bx_r, bhn_r = _fuse_direction(params["wih_r"], params["whh_r"],
                                              params["bih_r"], params["bhh_r"], HP)
    wi = jnp.stack([wi_f, wi_r])       # (2, E, 3HP)
    wh = jnp.stack([wh_f, wh_r])       # (2, HP, 3HP)
    bx = jnp.stack([bx_f, bx_r])       # (2, 1, 3HP)
    bhn = jnp.stack([bhn_f, bhn_r])    # (2, 1, HP)

    flops = 2 * 2 * T * Bp * E * 3 * HP + 2 * 2 * T * Bp * HP * 3 * HP
    transcendentals = 2 * T * Bp * 3 * HP
    bytes_accessed = 4 * (T * Bp * E + 2 * (E * 3 * HP + HP * 3 * HP + 4 * HP)
                          + 2 * T * Bp * HP + 2 * Bp * HP)

    out_dirs, hid_p = pl.pallas_call(
        bigru_dir_kernel,
        out_shape=(jax.ShapeDtypeStruct((2, T, Bp, HP), jnp.float32),
                   jax.ShapeDtypeStruct((2, Bp, HP), jnp.float32)),
        grid=(2,),                      # direction axis: fwd / bwd chains are independent
        in_specs=[
            pl.BlockSpec((T, Bp, E), lambda d: (0, 0, 0)),                # shared x
            pl.BlockSpec((None, E, 3 * HP), lambda d: (d, 0, 0)),         # per-dir W_i
            pl.BlockSpec((None, 1, 3 * HP), lambda d: (d, 0, 0)),         # per-dir b_x
            pl.BlockSpec((None, HP, 3 * HP), lambda d: (d, 0, 0)),        # per-dir W_h
            pl.BlockSpec((None, 1, HP), lambda d: (d, 0, 0)),             # per-dir b_hn
        ],
        out_specs=(
            pl.BlockSpec((None, T, Bp, HP), lambda d: (d, 0, 0, 0)),      # per-dir outputs
            pl.BlockSpec((None, Bp, HP), lambda d: (d, 0, 0)),            # per-dir final h
        ),
        scratch_shapes=[pltpu.VMEM((T, Bp, 3 * HP), jnp.float32)],        # staged gx
        compiler_params=pltpu.CompilerParams(
            # "parallel": on v7x the two directions shard across the 2 TensorCores;
            # on v5e/v6e the axis simply iterates (no cost).
            dimension_semantics=("parallel",),
            vmem_limit_bytes=32 * 1024 * 1024,   # explicit; tiny footprint at these shapes
        ),
        cost_estimate=pl.CostEstimate(flops=flops,
                                      transcendentals=transcendentals,
                                      bytes_accessed=bytes_accessed),
    )(x, wi, bx, wh, bhn)

    # Tiny epilogue: fwd + bwd sum (== outputs[:,:,:H] + outputs[:,:,H:] in PyTorch) and
    # un-pad batch/hidden.
    outputs = (out_dirs[0] + out_dirs[1])[:, :B, :H]
    hidden = hid_p[:, :B, :H]
    return outputs, hidden


# ----------------------------------------------------------------------------- reference


def _gru_cell(x_t, h_prev, w_i, w_h, b_i, b_h):
    """One PyTorch-convention GRU step (gate order r, z, n). Pure-JAX reference only."""
    i_r = jnp.dot(x_t, w_i[0], preferred_element_type=jnp.float32) + b_i[0]
    i_z = jnp.dot(x_t, w_i[1], preferred_element_type=jnp.float32) + b_i[1]
    i_n = jnp.dot(x_t, w_i[2], preferred_element_type=jnp.float32) + b_i[2]
    h_r = jnp.dot(h_prev, w_h[0], preferred_element_type=jnp.float32) + b_h[0]
    h_z = jnp.dot(h_prev, w_h[1], preferred_element_type=jnp.float32) + b_h[1]
    h_n = jnp.dot(h_prev, w_h[2], preferred_element_type=jnp.float32) + b_h[2]
    r = jax.nn.sigmoid(i_r + h_r)
    z = jax.nn.sigmoid(i_z + h_z)
    n = jnp.tanh(i_n + r * h_n)
    return (1.0 - z) * n + z * h_prev


def encoder_reference(src, params):
    """Pure-JAX reference (unfused per-gate math, PyTorch semantics) for correctness checking."""
    x = jnp.take(params["embed"], src, axis=0)
    T, B, _ = x.shape
    H = params["whh_f"].shape[-1]

    def run(x_seq, wih, whh, bih, bhh):
        w_i = tuple(wih[g] for g in range(3))
        w_h = tuple(whh[g] for g in range(3))
        b_i = tuple(bih[g] for g in range(3))
        b_h = tuple(bhh[g] for g in range(3))

        def step(h, x_t):
            h_new = _gru_cell(x_t, h, w_i, w_h, b_i, b_h)
            return h_new, h_new

        h_last, ys = lax.scan(step, jnp.zeros((B, H), jnp.float32), x_seq)
        return ys, h_last

    out_f, h_f = run(x, params["wih_f"], params["whh_f"], params["bih_f"], params["bhh_f"])
    out_r_rev, h_r = run(x[::-1],
                         params["wih_r"], params["whh_r"], params["bih_r"], params["bhh_r"])
    out_r = out_r_rev[::-1]
    return out_f + out_r, jnp.stack([h_f, h_r], axis=0)


if __name__ == "__main__":
    # Small shapes: vocab=16, embed=32, hidden=32, seq_len=8, batch=2
    INPUT_SIZE, EMBED_SIZE, HIDDEN_SIZE = 16, 32, 32
    T, B = 8, 2

    key = jax.random.PRNGKey(0)
    k_src, k_params = jax.random.split(key)
    src = jax.random.randint(k_src, (T, B), 0, INPUT_SIZE, dtype=jnp.int32)
    params = init_params(k_params, INPUT_SIZE, EMBED_SIZE, HIDDEN_SIZE)

    out, hid = jax.jit(encoder_forward)(src, params)
    out, hid = jax.block_until_ready((out, hid))

    out_ref, hid_ref = encoder_reference(src, params)
    assert out.shape == (T, B, HIDDEN_SIZE)
    assert hid.shape == (2, B, HIDDEN_SIZE)
    assert jnp.allclose(out, out_ref, rtol=1e-5, atol=1e-5)
    assert jnp.allclose(hid, hid_ref, rtol=1e-5, atol=1e-5)

    print("KERNEL_OK")
</pallas_src>

<mosaic_0001>
module attributes {stable_mosaic.version = 11 : i64} {
  func.func @bigru_dir_kernel(%arg0: i32, %arg1: memref<8x8x32xf32, #tpu.memory_space<vmem>>, %arg2: memref<1x32x384xf32, #tpu.memory_space<vmem>>, %arg3: memref<1x1x384xf32, #tpu.memory_space<vmem>>, %arg4: memref<1x128x384xf32, #tpu.memory_space<vmem>>, %arg5: memref<1x1x128xf32, #tpu.memory_space<vmem>>, %arg6: memref<1x8x8x128xf32, #tpu.memory_space<vmem>>, %arg7: memref<1x8x128xf32, #tpu.memory_space<vmem>>, %arg8: memref<8x8x384xf32, #tpu.memory_space<vmem>>) attributes {dimension_semantics = [#tpu.dimension_semantics<parallel>], iteration_bounds = array<i64: 2>, scalar_prefetch = 0 : i64, scratch_operands = 1 : i64, tpu.core_type = #tpu.core_type<tc>, window_params = [{pipeline_mode = #tpu.pipeline_mode<synchronous>, transform_indices = @transform_0, window_bounds = array<i64: 8, 8, 32>}, {transform_indices = @transform_1, window_bounds = array<i64: 1, 32, 384>}, {transform_indices = @transform_2, window_bounds = array<i64: 1, 1, 384>}, {transform_indices = @transform_3, window_bounds = array<i64: 1, 128, 384>}, {transform_indices = @transform_4, window_bounds = array<i64: 1, 1, 128>}, {transform_indices = @transform_5, window_bounds = array<i64: 1, 8, 8, 128>}, {transform_indices = @transform_6, window_bounds = array<i64: 1, 8, 128>}]} {
    %c0 = arith.constant 0 : index
    %c0_0 = arith.constant 0 : index
    %c0_1 = arith.constant 0 : index
    %0 = vector.load %arg1[%c0, %c0_0, %c0_1] : memref<8x8x32xf32, #tpu.memory_space<vmem>>, vector<8x8x32xf32>
    %1 = vector.shape_cast %0 : vector<8x8x32xf32> to vector<64x32xf32>
    %c0_2 = arith.constant 0 : index
    %c0_3 = arith.constant 0 : index
    %c0_4 = arith.constant 0 : index
    %2 = vector.load %arg2[%c0_2, %c0_3, %c0_4] : memref<1x32x384xf32, #tpu.memory_space<vmem>>, vector<1x32x384xf32>
    %3 = vector.shape_cast %2 : vector<1x32x384xf32> to vector<32x384xf32>
    %cst = arith.constant dense<0.000000e+00> : vector<64x384xf32>
    %4 = tpu.matmul %1, %3, %cst {dimension_numbers = #tpu.dot_dimension_numbers<[1], [0], [0], [1], [0, 0, 1, 1], [], []>} : vector<64x32xf32>, vector<32x384xf32>, vector<64x384xf32> -> vector<64x384xf32>
    %5 = vector.shape_cast %4 : vector<64x384xf32> to vector<8x8x384xf32>
    %c0_5 = arith.constant 0 : index
    %c0_6 = arith.constant 0 : index
    %c0_7 = arith.constant 0 : index
    %6 = vector.load %arg3[%c0_5, %c0_6, %c0_7] : memref<1x1x384xf32, #tpu.memory_space<vmem>>, vector<1x1x384xf32>
    %7 = vector.shape_cast %6 : vector<1x1x384xf32> to vector<1x384xf32>
    %8 = vector.shape_cast %7 : vector<1x384xf32> to vector<1x1x384xf32>
    %9 = vector.broadcast %8 : vector<1x1x384xf32> to vector<8x8x384xf32>
    %10 = arith.addf %5, %9 : vector<8x8x384xf32>
    %c0_8 = arith.constant 0 : index
    %c0_9 = arith.constant 0 : index
    %c0_10 = arith.constant 0 : index
    %11 = vector.load %arg8[%c0_8, %c0_9, %c0_10] : memref<8x8x384xf32, #tpu.memory_space<vmem>>, vector<8x8x384xf32>
    tpu.vector_store %arg8[%c0_8, %c0_9, %c0_10], %10 {strides = array<i32>} : memref<8x8x384xf32, #tpu.memory_space<vmem>>, vector<8x8x384xf32>,
    %c0_11 = arith.constant 0 : index
    %c0_12 = arith.constant 0 : index
    %c0_13 = arith.constant 0 : index
    %12 = vector.load %arg4[%c0_11, %c0_12, %c0_13] : memref<1x128x384xf32, #tpu.memory_space<vmem>>, vector<1x128x384xf32>
    %13 = vector.shape_cast %12 : vector<1x128x384xf32> to vector<128x384xf32>
    %c0_14 = arith.constant 0 : index
    %c0_15 = arith.constant 0 : index
    %c0_16 = arith.constant 0 : index
    %14 = vector.load %arg5[%c0_14, %c0_15, %c0_16] : memref<1x1x128xf32, #tpu.memory_space<vmem>>, vector<1x1x128xf32>
    %15 = vector.shape_cast %14 : vector<1x1x128xf32> to vector<1x128xf32>
    %cst_17 = arith.constant 0.000000e+00 : f32
    %16 = vector.broadcast %cst_17 : f32 to vector<8x128xf32>
    %c0_i32 = arith.constant 0 : i32
    %c0_i32_18 = arith.constant 0 : i32
    %17 = arith.cmpi eq, %arg0, %c0_i32_18 : i32
    %c7_i32 = arith.constant 7 : i32
    %18 = arith.subi %c7_i32, %c0_i32 : i32
    %19 = arith.select %17, %c0_i32, %18 : i32
    %20 = arith.index_cast %19 : i32 to index
    %c0_19 = arith.constant 0 : index
    %c0_20 = arith.constant 0 : index
    %21 = vector.load %arg8[%20, %c0_19, %c0_20] : memref<8x8x384xf32, #tpu.memory_space<vmem>>, vector<1x8x384xf32>
    %22 = vector.shape_cast %21 : vector<1x8x384xf32> to vector<8x384xf32>
    %cst_21 = arith.constant dense<0.000000e+00> : vector<8x384xf32>
    %23 = tpu.matmul %16, %13, %cst_21 {dimension_numbers = #tpu.dot_dimension_numbers<[1], [0], [0], [1], [0, 0, 1, 1], [], []>} : vector<8x128xf32>, vector<128x384xf32>, vector<8x384xf32> -> vector<8x384xf32>
    %24 = vector.extract_strided_slice %22 {offsets = [0, 0], sizes = [8, 128], strides = [1, 1]} : vector<8x384xf32> to vector<8x128xf32>
    %25 = vector.extract_strided_slice %23 {offsets = [0, 0], sizes = [8, 128], strides = [1, 1]} : vector<8x384xf32> to vector<8x128xf32>
    %26 = arith.addf %24, %25 : vector<8x128xf32>
    %27 = arith.negf %26 : vector<8x128xf32>
    %28 = math.exp %27 : vector<8x128xf32>
    %cst_22 = arith.constant 1.000000e+00 : f32
    %29 = vector.broadcast %cst_22 : f32 to vector<8x128xf32>
    %30 = arith.addf %29, %28 : vector<8x128xf32>
    %31 = arith.divf %29, %30 : vector<8x128xf32>
    %32 = vector.extract_strided_slice %22 {offsets = [0, 128], sizes = [8, 128], strides = [1, 1]} : vector<8x384xf32> to vector<8x128xf32>
    %33 = vector.extract_strided_slice %23 {offsets = [0, 128], sizes = [8, 128], strides = [1, 1]} : vector<8x384xf32> to vector<8x128xf32>
    %34 = arith.addf %32, %33 : vector<8x128xf32>
    %35 = arith.negf %34 : vector<8x128xf32>
    %36 = math.exp %35 : vector<8x128xf32>
    %cst_23 = arith.constant 1.000000e+00 : f32
    %37 = vector.broadcast %cst_23 : f32 to vector<8x128xf32>
    %38 = arith.addf %37, %36 : vector<8x128xf32>
    %39 = arith.divf %37, %38 : vector<8x128xf32>
    %40 = vector.extract_strided_slice %22 {offsets = [0, 256], sizes = [8, 128], strides = [1, 1]} : vector<8x384xf32> to vector<8x128xf32>
    %41 = vector.extract_strided_slice %23 {offsets = [0, 256], sizes = [8, 128], strides = [1, 1]} : vector<8x384xf32> to vector<8x128xf32>
    %42 = vector.broadcast %15 : vector<1x128xf32> to vector<8x128xf32>
    %43 = arith.addf %41, %42 : vector<8x128xf32>
    %44 = arith.mulf %31, %43 : vector<8x128xf32>
    %45 = arith.addf %40, %44 : vector<8x128xf32>
    %46 = math.tanh %45 : vector<8x128xf32>
    %cst_24 = arith.constant 1.000000e+00 : f32
    %47 = vector.broadcast %cst_24 : f32 to vector<8x128xf32>
    %48 = arith.subf %47, %39 : vector<8x128xf32>
    %49 = arith.mulf %48, %46 : vector<8x128xf32>
    %50 = arith.mulf %39, %16 : vector<8x128xf32>
    %51 = arith.addf %49, %50 : vector<8x128xf32>
    %c0_25 = arith.constant 0 : index
    %52 = arith.index_cast %19 : i32 to index
    %c0_26 = arith.constant 0 : index
    %c0_27 = arith.constant 0 : index
    %53 = vector.load %arg6[%c0_25, %52, %c0_26, %c0_27] : memref<1x8x8x128xf32, #tpu.memory_space<vmem>>, vector<1x1x8x128xf32>
    %54 = vector.shape_cast %53 : vector<1x1x8x128xf32> to vector<8x128xf32>
    %55 = vector.shape_cast %51 : vector<8x128xf32> to vector<1x1x8x128xf32>
    tpu.vector_store %arg6[%c0_25, %52, %c0_26, %c0_27], %55 {strides = array<i32>} : memref<1x8x8x128xf32, #tpu.memory_space<vmem>>, vector<1x1x8x128xf32>,
    %c1_i32 = arith.constant 1 : i32
    %c0_i32_28 = arith.constant 0 : i32
    %56 = arith.cmpi eq, %arg0, %c0_i32_28 : i32
    %c7_i32_29 = arith.constant 7 : i32
    %57 = arith.subi %c7_i32_29, %c1_i32 : i32
    %58 = arith.select %56, %c1_i32, %57 : i32
    %59 = arith.index_cast %58 : i32 to index
    %c0_30 = arith.constant 0 : index
    %c0_31 = arith.constant 0 : index
    %60 = vector.load %arg8[%59, %c0_30, %c0_31] : memref<8x8x384xf32, #tpu.memory_space<vmem>>, vector<1x8x384xf32>
    %61 = vector.shape_cast %60 : vector<1x8x384xf32> to vector<8x384xf32>
    %cst_32 = arith.constant dense<0.000000e+00> : vector<8x384xf32>
    %62 = tpu.matmul %51, %13, %cst_32 {dimension_numbers = #tpu.dot_dimension_numbers<[1], [0], [0], [1], [0, 0, 1, 1], [], []>} : vector<8x128xf32>, vector<128x384xf32>, vector<8x384xf32> -> vector<8x384xf32>
    %63 = vector.extract_strided_slice %61 {offsets = [0, 0], sizes = [8, 128], strides = [1, 1]} : vector<8x384xf32> to vector<8x128xf32>
    %64 = vector.extract_strided_slice %62 {offsets = [0, 0], sizes = [8, 128], strides = [1, 1]} : vector<8x384xf32> to vector<8x128xf32>
    %65 = arith.addf %63, %64 : vector<8x128xf32>
    %66 = arith.negf %65 : vector<8x128xf32>
    %67 = math.exp %66 : vector<8x128xf32>
    %cst_33 = arith.constant 1.000000e+00 : f32
    %68 = vector.broadcast %cst_33 : f32 to vector<8x128xf32>
    %69 = arith.addf %68, %67 : vector<8x128xf32>
    %70 = arith.divf %68, %69 : vector<8x128xf32>
    %71 = vector.extract_strided_slice %61 {offsets = [0, 128], sizes = [8, 128], strides = [1, 1]} : vector<8x384xf32> to vector<8x128xf32>
    %72 = vector.extract_strided_slice %62 {offsets = [0, 128], sizes = [8, 128], strides = [1, 1]} : vector<8x384xf32> to vector<8x128xf32>
    %73 = arith.addf %71, %72 : vector<8x128xf32>
    %74 = arith.negf %73 : vector<8x128xf32>
    %75 = math.exp %74 : vector<8x128xf32>
    %cst_34 = arith.constant 1.000000e+00 : f32
    %76 = vector.broadcast %cst_34 : f32 to vector<8x128xf32>
    %77 = arith.addf %76, %75 : vector<8x128xf32>
    %78 = arith.divf %76, %77 : vector<8x128xf32>
    %79 = vector.extract_strided_slice %61 {offsets = [0, 256], sizes = [8, 128], strides = [1, 1]} : vector<8x384xf32> to vector<8x128xf32>
    %80 = vector.extract_strided_slice %62 {offsets = [0, 256], sizes = [8, 128], strides = [1, 1]} : vector<8x384xf32> to vector<8x128xf32>
    %81 = vector.broadcast %15 : vector<1x128xf32> to vector<8x128xf32>
    %82 = arith.addf %80, %81 : vector<8x128xf32>
    %83 = arith.mulf %70, %82 : vector<8x128xf32>
    %84 = arith.addf %79, %83 : vector<8x128xf32>
    %85 = math.tanh %84 : vector<8x128xf32>
    %cst_35 = arith.constant 1.000000e+00 : f32
    %86 = vector.broadcast %cst_35 : f32 to vector<8x128xf32>
    %87 = arith.subf %86, %78 : vector<8x128xf32>
    %88 = arith.mulf %87, %85 : vector<8x128xf32>
    %89 = arith.mulf %78, %51 : vector<8x128xf32>
    %90 = arith.addf %88, %89 : vector<8x128xf32>
    %c0_36 = arith.constant 0 : index
    %91 = arith.index_cast %58 : i32 to index
    %c0_37 = arith.constant 0 : index
    %c0_38 = arith.constant 0 : index
    %92 = vector.load %arg6[%c0_36, %91, %c0_37, %c0_38] : memref<1x8x8x128xf32, #tpu.memory_space<vmem>>, vector<1x1x8x128xf32>
    %93 = vector.shape_cast %92 : vector<1x1x8x128xf32> to vector<8x128xf32>
    %94 = vector.shape_cast %90 : vector<8x128xf32> to vector<1x1x8x128xf32>
    tpu.vector_store %arg6[%c0_36, %91, %c0_37, %c0_38], %94 {strides = array<i32>} : memref<1x8x8x128xf32, #tpu.memory_space<vmem>>, vector<1x1x8x128xf32>,
    %c2_i32 = arith.constant 2 : i32
    %c0_i32_39 = arith.constant 0 : i32
    %95 = arith.cmpi eq, %arg0, %c0_i32_39 : i32
    %c7_i32_40 = arith.constant 7 : i32
    %96 = arith.subi %c7_i32_40, %c2_i32 : i32
    %97 = arith.select %95, %c2_i32, %96 : i32
    %98 = arith.index_cast %97 : i32 to index
    %c0_41 = arith.constant 0 : index
    %c0_42 = arith.constant 0 : index
    %99 = vector.load %arg8[%98, %c0_41, %c0_42] : memref<8x8x384xf32, #tpu.memory_space<vmem>>, vector<1x8x384xf32>
    %100 = vector.shape_cast %99 : vector<1x8x384xf32> to vector<8x384xf32>
    %cst_43 = arith.constant dense<0.000000e+00> : vector<8x384xf32>
    %101 = tpu.matmul %90, %13, %cst_43 {dimension_numbers = #tpu.dot_dimension_numbers<[1], [0], [0], [1], [0, 0, 1, 1], [], []>} : vector<8x128xf32>, vector<128x384xf32>, vector<8x384xf32> -> vector<8x384xf32>
    %102 = vector.extract_strided_slice %100 {offsets = [0, 0], sizes = [8, 128], strides = [1, 1]} : vector<8x384xf32> to vector<8x128xf32>
    %103 = vector.extract_strided_slice %101 {offsets = [0, 0], sizes = [8, 128], strides = [1, 1]} : vector<8x384xf32> to vector<8x128xf32>
    %104 = arith.addf %102, %103 : vector<8x128xf32>
    %105 = arith.negf %104 : vector<8x128xf32>
    %106 = math.exp %105 : vector<8x128xf32>
    %cst_44 = arith.constant 1.000000e+00 : f32
    %107 = vector.broadcast %cst_44 : f32 to vector<8x128xf32>
    %108 = arith.addf %107, %106 : vector<8x128xf32>
    %109 = arith.divf %107, %108 : vector<8x128xf32>
    %110 = vector.extract_strided_slice %100 {offsets = [0, 128], sizes = [8, 128], strides = [1, 1]} : vector<8x384xf32> to vector<8x128xf32>
    %111 = vector.extract_strided_slice %101 {offsets = [0, 128], sizes = [8, 128], strides = [1, 1]} : vector<8x384xf32> to vector<8x128xf32>
    %112 = arith.addf %110, %111 : vector<8x128xf32>
    %113 = arith.negf %112 : vector<8x128xf32>
    %114 = math.exp %113 : vector<8x128xf32>
    %cst_45 = arith.constant 1.000000e+00 : f32
    %115 = vector.broadcast %cst_45 : f32 to vector<8x128xf32>
    %116 = arith.addf %115, %114 : vector<8x128xf32>
    %117 = arith.divf %115, %116 : vector<8x128xf32>
    %118 = vector.extract_strided_slice %100 {offsets = [0, 256], sizes = [8, 128], strides = [1, 1]} : vector<8x384xf32> to vector<8x128xf32>
    %119 = vector.extract_strided_slice %101 {offsets = [0, 256], sizes = [8, 128], strides = [1, 1]} : vector<8x384xf32> to vector<8x128xf32>
    %120 = vector.broadcast %15 : vector<1x128xf32> to vector<8x128xf32>
    %121 = arith.addf %119, %120 : vector<8x128xf32>
    %122 = arith.mulf %109, %121 : vector<8x128xf32>
    %123 = arith.addf %118, %122 : vector<8x128xf32>
    %124 = math.tanh %123 : vector<8x128xf32>
    %cst_46 = arith.constant 1.000000e+00 : f32
    %125 = vector.broadcast %cst_46 : f32 to vector<8x128xf32>
    %126 = arith.subf %125, %117 : vector<8x128xf32>
    %127 = arith.mulf %126, %124 : vector<8x128xf32>
    %128 = arith.mulf %117, %90 : vector<8x128xf32>
    %129 = arith.addf %127, %128 : vector<8x128xf32>
    %c0_47 = arith.constant 0 : index
    %130 = arith.index_cast %97 : i32 to index
    %c0_48 = arith.constant 0 : index
    %c0_49 = arith.constant 0 : index
    %131 = vector.load %arg6[%c0_47, %130, %c0_48, %c0_49] : memref<1x8x8x128xf32, #tpu.memory_space<vmem>>, vector<1x1x8x128xf32>
    %132 = vector.shape_cast %131 : vector<1x1x8x128xf32> to vector<8x128xf32>
    %133 = vector.shape_cast %129 : vector<8x128xf32> to vector<1x1x8x128xf32>
    tpu.vector_store %arg6[%c0_47, %130, %c0_48, %c0_49], %133 {strides = array<i32>} : memref<1x8x8x128xf32, #tpu.memory_space<vmem>>, vector<1x1x8x128xf32>,
    %c3_i32 = arith.constant 3 : i32
    %c0_i32_50 = arith.constant 0 : i32
    %134 = arith.cmpi eq, %arg0, %c0_i32_50 : i32
    %c7_i32_51 = arith.constant 7 : i32
    %135 = arith.subi %c7_i32_51, %c3_i32 : i32
    %136 = arith.select %134, %c3_i32, %135 : i32
    %137 = arith.index_cast %136 : i32 to index
    %c0_52 = arith.constant 0 : index
    %c0_53 = arith.constant 0 : index
    %138 = vector.load %arg8[%137, %c0_52, %c0_53] : memref<8x8x384xf32, #tpu.memory_space<vmem>>, vector<1x8x384xf32>
    %139 = vector.shape_cast %138 : vector<1x8x384xf32> to vector<8x384xf32>
    %cst_54 = arith.constant dense<0.000000e+00> : vector<8x384xf32>
    %140 = tpu.matmul %129, %13, %cst_54 {dimension_numbers = #tpu.dot_dimension_numbers<[1], [0], [0], [1], [0, 0, 1, 1], [], []>} : vector<8x128xf32>, vector<128x384xf32>, vector<8x384xf32> -> vector<8x384xf32>
    %141 = vector.extract_strided_slice %139 {offsets = [0, 0], sizes = [8, 128], strides = [1, 1]} : vector<8x384xf32> to vector<8x128xf32>
    %142 = vector.extract_strided_slice %140 {offsets = [0, 0], sizes = [8, 128], strides = [1, 1]} : vector<8x384xf32> to vector<8x128xf32>
    %143 = arith.addf %141, %142 : vector<8x128xf32>
    %144 = arith.negf %143 : vector<8x128xf32>
    %145 = math.exp %144 : vector<8x128xf32>
    %cst_55 = arith.constant 1.000000e+00 : f32
    %146 = vector.broadcast %cst_55 : f32 to vector<8x128xf32>
    %147 = arith.addf %146, %145 : vector<8x128xf32>
    %148 = arith.divf %146, %147 : vector<8x128xf32>
    %149 = vector.extract_strided_slice %139 {offsets = [0, 128], sizes = [8, 128], strides = [1, 1]} : vector<8x384xf32> to vector<8x128xf32>
    %150 = vector.extract_strided_slice %140 {offsets = [0, 128], sizes = [8, 128], strides = [1, 1]} : vector<8x384xf32> to vector<8x128xf32>
    %151 = arith.addf %149, %150 : vector<8x128xf32>
    %152 = arith.negf %151 : vector<8x128xf32>
    %153 = math.exp %152 : vector<8x128xf32>
    %cst_56 = arith.constant 1.000000e+00 : f32
    %154 = vector.broadcast %cst_56 : f32 to vector<8x128xf32>
    %155 = arith.addf %154, %153 : vector<8x128xf32>
    %156 = arith.divf %154, %155 : vector<8x128xf32>
    %157 = vector.extract_strided_slice %139 {offsets = [0, 256], sizes = [8, 128], strides = [1, 1]} : vector<8x384xf32> to vector<8x128xf32>
    %158 = vector.extract_strided_slice %140 {offsets = [0, 256], sizes = [8, 128], strides = [1, 1]} : vector<8x384xf32> to vector<8x128xf32>
    %159 = vector.broadcast %15 : vector<1x128xf32> to vector<8x128xf32>
    %160 = arith.addf %158, %159 : vector<8x128xf32>
    %161 = arith.mulf %148, %160 : vector<8x128xf32>
    %162 = arith.addf %157, %161 : vector<8x128xf32>
    %163 = math.tanh %162 : vector<8x128xf32>
    %cst_57 = arith.constant 1.000000e+00 : f32
    %164 = vector.broadcast %cst_57 : f32 to vector<8x128xf32>
    %165 = arith.subf %164, %156 : vector<8x128xf32>
    %166 = arith.mulf %165, %163 : vector<8x128xf32>
    %167 = arith.mulf %156, %129 : vector<8x128xf32>
    %168 = arith.addf %166, %167 : vector<8x128xf32>
    %c0_58 = arith.constant 0 : index
    %169 = arith.index_cast %136 : i32 to index
    %c0_59 = arith.constant 0 : index
    %c0_60 = arith.constant 0 : index
    %170 = vector.load %arg6[%c0_58, %169, %c0_59, %c0_60] : memref<1x8x8x128xf32, #tpu.memory_space<vmem>>, vector<1x1x8x128xf32>
    %171 = vector.shape_cast %170 : vector<1x1x8x128xf32> to vector<8x128xf32>
    %172 = vector.shape_cast %168 : vector<8x128xf32> to vector<1x1x8x128xf32>
    tpu.vector_store %arg6[%c0_58, %169, %c0_59, %c0_60], %172 {strides = array<i32>} : memref<1x8x8x128xf32, #tpu.memory_space<vmem>>, vector<1x1x8x128xf32>,
    %c4_i32 = arith.constant 4 : i32
    %c0_i32_61 = arith.constant 0 : i32
    %173 = arith.cmpi eq, %arg0, %c0_i32_61 : i32
    %c7_i32_62 = arith.constant 7 : i32
    %174 = arith.subi %c7_i32_62, %c4_i32 : i32
    %175 = arith.select %173, %c4_i32, %174 : i32
    %176 = arith.index_cast %175 : i32 to index
    %c0_63 = arith.constant 0 : index
    %c0_64 = arith.constant 0 : index
    %177 = vector.load %arg8[%176, %c0_63, %c0_64] : memref<8x8x384xf32, #tpu.memory_space<vmem>>, vector<1x8x384xf32>
    %178 = vector.shape_cast %177 : vector<1x8x384xf32> to vector<8x384xf32>
    %cst_65 = arith.constant dense<0.000000e+00> : vector<8x384xf32>
    %179 = tpu.matmul %168, %13, %cst_65 {dimension_numbers = #tpu.dot_dimension_numbers<[1], [0], [0], [1], [0, 0, 1, 1], [], []>} : vector<8x128xf32>, vector<128x384xf32>, vector<8x384xf32> -> vector<8x384xf32>
    %180 = vector.extract_strided_slice %178 {offsets = [0, 0], sizes = [8, 128], strides = [1, 1]} : vector<8x384xf32> to vector<8x128xf32>
    %181 = vector.extract_strided_slice %179 {offsets = [0, 0], sizes = [8, 128], strides = [1, 1]} : vector<8x384xf32> to vector<8x128xf32>
    %182 = arith.addf %180, %181 : vector<8x128xf32>
    %183 = arith.negf %182 : vector<8x128xf32>
    %184 = math.exp %183 : vector<8x128xf32>
    %cst_66 = arith.constant 1.000000e+00 : f32
    %185 = vector.broadcast %cst_66 : f32 to vector<8x128xf32>
    %186 = arith.addf %185, %184 : vector<8x128xf32>
    %187 = arith.divf %185, %186 : vector<8x128xf32>
    %188 = vector.extract_strided_slice %178 {offsets = [0, 128], sizes = [8, 128], strides = [1, 1]} : vector<8x384xf32> to vector<8x128xf32>
    %189 = vector.extract_strided_slice %179 {offsets = [0, 128], sizes = [8, 128], strides = [1, 1]} : vector<8x384xf32> to vector<8x128xf32>
    %190 = arith.addf %188, %189 : vector<8x128xf32>
    %191 = arith.negf %190 : vector<8x128xf32>
    %192 = math.exp %191 : vector<8x128xf32>
    %cst_67 = arith.constant 1.000000e+00 : f32
    %193 = vector.broadcast %cst_67 : f32 to vector<8x128xf32>
    %194 = arith.addf %193, %192 : vector<8x128xf32>
    %195 = arith.divf %193, %194 : vector<8x128xf32>
    %196 = vector.extract_strided_slice %178 {offsets = [0, 256], sizes = [8, 128], strides = [1, 1]} : vector<8x384xf32> to vector<8x128xf32>
    %197 = vector.extract_strided_slice %179 {offsets = [0, 256], sizes = [8, 128], strides = [1, 1]} : vector<8x384xf32> to vector<8x128xf32>
    %198 = vector.broadcast %15 : vector<1x128xf32> to vector<8x128xf32>
    %199 = arith.addf %197, %198 : vector<8x128xf32>
    %200 = arith.mulf %187, %199 : vector<8x128xf32>
    %201 = arith.addf %196, %200 : vector<8x128xf32>
    %202 = math.tanh %201 : vector<8x128xf32>
    %cst_68 = arith.constant 1.000000e+00 : f32
    %203 = vector.broadcast %cst_68 : f32 to vector<8x128xf32>
    %204 = arith.subf %203, %195 : vector<8x128xf32>
    %205 = arith.mulf %204, %202 : vector<8x128xf32>
    %206 = arith.mulf %195, %168 : vector<8x128xf32>
    %207 = arith.addf %205, %206 : vector<8x128xf32>
    %c0_69 = arith.constant 0 : index
    %208 = arith.index_cast %175 : i32 to index
    %c0_70 = arith.constant 0 : index
    %c0_71 = arith.constant 0 : index
    %209 = vector.load %arg6[%c0_69, %208, %c0_70, %c0_71] : memref<1x8x8x128xf32, #tpu.memory_space<vmem>>, vector<1x1x8x128xf32>
    %210 = vector.shape_cast %209 : vector<1x1x8x128xf32> to vector<8x128xf32>
    %211 = vector.shape_cast %207 : vector<8x128xf32> to vector<1x1x8x128xf32>
    tpu.vector_store %arg6[%c0_69, %208, %c0_70, %c0_71], %211 {strides = array<i32>} : memref<1x8x8x128xf32, #tpu.memory_space<vmem>>, vector<1x1x8x128xf32>,
    %c5_i32 = arith.constant 5 : i32
    %c0_i32_72 = arith.constant 0 : i32
    %212 = arith.cmpi eq, %arg0, %c0_i32_72 : i32
    %c7_i32_73 = arith.constant 7 : i32
    %213 = arith.subi %c7_i32_73, %c5_i32 : i32
    %214 = arith.select %212, %c5_i32, %213 : i32
    %215 = arith.index_cast %214 : i32 to index
    %c0_74 = arith.constant 0 : index
    %c0_75 = arith.constant 0 : index
    %216 = vector.load %arg8[%215, %c0_74, %c0_75] : memref<8x8x384xf32, #tpu.memory_space<vmem>>, vector<1x8x384xf32>
    %217 = vector.shape_cast %216 : vector<1x8x384xf32> to vector<8x384xf32>
    %cst_76 = arith.constant dense<0.000000e+00> : vector<8x384xf32>
    %218 = tpu.matmul %207, %13, %cst_76 {dimension_numbers = #tpu.dot_dimension_numbers<[1], [0], [0], [1], [0, 0, 1, 1], [], []>} : vector<8x128xf32>, vector<128x384xf32>, vector<8x384xf32> -> vector<8x384xf32>
    %219 = vector.extract_strided_slice %217 {offsets = [0, 0], sizes = [8, 128], strides = [1, 1]} : vector<8x384xf32> to vector<8x128xf32>
    %220 = vector.extract_strided_slice %218 {offsets = [0, 0], sizes = [8, 128], strides = [1, 1]} : vector<8x384xf32> to vector<8x128xf32>
    %221 = arith.addf %219, %220 : vector<8x128xf32>
    %222 = arith.negf %221 : vector<8x128xf32>
    %223 = math.exp %222 : vector<8x128xf32>
    %cst_77 = arith.constant 1.000000e+00 : f32
    %224 = vector.broadcast %cst_77 : f32 to vector<8x128xf32>
    %225 = arith.addf %224, %223 : vector<8x128xf32>
    %226 = arith.divf %224, %225 : vector<8x128xf32>
    %227 = vector.extract_strided_slice %217 {offsets = [0, 128], sizes = [8, 128], strides = [1, 1]} : vector<8x384xf32> to vector<8x128xf32>
    %228 = vector.extract_strided_slice %218 {offsets = [0, 128], sizes = [8, 128], strides = [1, 1]} : vector<8x384xf32> to vector<8x128xf32>
    %229 = arith.addf %227, %228 : vector<8x128xf32>
    %230 = arith.negf %229 : vector<8x128xf32>
    %231 = math.exp %230 : vector<8x128xf32>
    %cst_78 = arith.constant 1.000000e+00 : f32
    %232 = vector.broadcast %cst_78 : f32 to vector<8x128xf32>
    %233 = arith.addf %232, %231 : vector<8x128xf32>
    %234 = arith.divf %232, %233 : vector<8x128xf32>
    %235 = vector.extract_strided_slice %217 {offsets = [0, 256], sizes = [8, 128], strides = [1, 1]} : vector<8x384xf32> to vector<8x128xf32>
    %236 = vector.extract_strided_slice %218 {offsets = [0, 256], sizes = [8, 128], strides = [1, 1]} : vector<8x384xf32> to vector<8x128xf32>
    %237 = vector.broadcast %15 : vector<1x128xf32> to vector<8x128xf32>
    %238 = arith.addf %236, %237 : vector<8x128xf32>
    %239 = arith.mulf %226, %238 : vector<8x128xf32>
    %240 = arith.addf %235, %239 : vector<8x128xf32>
    %241 = math.tanh %240 : vector<8x128xf32>
    %cst_79 = arith.constant 1.000000e+00 : f32
    %242 = vector.broadcast %cst_79 : f32 to vector<8x128xf32>
    %243 = arith.subf %242, %234 : vector<8x128xf32>
    %244 = arith.mulf %243, %241 : vector<8x128xf32>
    %245 = arith.mulf %234, %207 : vector<8x128xf32>
    %246 = arith.addf %244, %245 : vector<8x128xf32>
    %c0_80 = arith.constant 0 : index
    %247 = arith.index_cast %214 : i32 to index
    %c0_81 = arith.constant 0 : index
    %c0_82 = arith.constant 0 : index
    %248 = vector.load %arg6[%c0_80, %247, %c0_81, %c0_82] : memref<1x8x8x128xf32, #tpu.memory_space<vmem>>, vector<1x1x8x128xf32>
    %249 = vector.shape_cast %248 : vector<1x1x8x128xf32> to vector<8x128xf32>
    %250 = vector.shape_cast %246 : vector<8x128xf32> to vector<1x1x8x128xf32>
    tpu.vector_store %arg6[%c0_80, %247, %c0_81, %c0_82], %250 {strides = array<i32>} : memref<1x8x8x128xf32, #tpu.memory_space<vmem>>, vector<1x1x8x128xf32>,
    %c6_i32 = arith.constant 6 : i32
    %c0_i32_83 = arith.constant 0 : i32
    %251 = arith.cmpi eq, %arg0, %c0_i32_83 : i32
    %c7_i32_84 = arith.constant 7 : i32
    %252 = arith.subi %c7_i32_84, %c6_i32 : i32
    %253 = arith.select %251, %c6_i32, %252 : i32
    %254 = arith.index_cast %253 : i32 to index
    %c0_85 = arith.constant 0 : index
    %c0_86 = arith.constant 0 : index
    %255 = vector.load %arg8[%254, %c0_85, %c0_86] : memref<8x8x384xf32, #tpu.memory_space<vmem>>, vector<1x8x384xf32>
    %256 = vector.shape_cast %255 : vector<1x8x384xf32> to vector<8x384xf32>
    %cst_87 = arith.constant dense<0.000000e+00> : vector<8x384xf32>
    %257 = tpu.matmul %246, %13, %cst_87 {dimension_numbers = #tpu.dot_dimension_numbers<[1], [0], [0], [1], [0, 0, 1, 1], [], []>} : vector<8x128xf32>, vector<128x384xf32>, vector<8x384xf32> -> vector<8x384xf32>
    %258 = vector.extract_strided_slice %256 {offsets = [0, 0], sizes = [8, 128], strides = [1, 1]} : vector<8x384xf32> to vector<8x128xf32>
    %259 = vector.extract_strided_slice %257 {offsets = [0, 0], sizes = [8, 128], strides = [1, 1]} : vector<8x384xf32> to vector<8x128xf32>
    %260 = arith.addf %258, %259 : vector<8x128xf32>
    %261 = arith.negf %260 : vector<8x128xf32>
    %262 = math.exp %261 : vector<8x128xf32>
    %cst_88 = arith.constant 1.000000e+00 : f32
    %263 = vector.broadcast %cst_88 : f32 to vector<8x128xf32>
    %264 = arith.addf %263, %262 : vector<8x128xf32>
    %265 = arith.divf %263, %264 : vector<8x128xf32>
    %266 = vector.extract_strided_slice %256 {offsets = [0, 128], sizes = [8, 128], strides = [1, 1]} : vector<8x384xf32> to vector<8x128xf32>
    %267 = vector.extract_strided_slice %257 {offsets = [0, 128], sizes = [8, 128], strides = [1, 1]} : vector<8x384xf32> to vector<8x128xf32>
    %268 = arith.addf %266, %267 : vector<8x128xf32>
    %269 = arith.negf %268 : vector<8x128xf32>
    %270 = math.exp %269 : vector<8x128xf32>
    %cst_89 = arith.constant 1.000000e+00 : f32
    %271 = vector.broadcast %cst_89 : f32 to vector<8x128xf32>
    %272 = arith.addf %271, %270 : vector<8x128xf32>
    %273 = arith.divf %271, %272 : vector<8x128xf32>
    %274 = vector.extract_strided_slice %256 {offsets = [0, 256], sizes = [8, 128], strides = [1, 1]} : vector<8x384xf32> to vector<8x128xf32>
    %275 = vector.extract_strided_slice %257 {offsets = [0, 256], sizes = [8, 128], strides = [1, 1]} : vector<8x384xf32> to vector<8x128xf32>
    %276 = vector.broadcast %15 : vector<1x128xf32> to vector<8x128xf32>
    %277 = arith.addf %275, %276 : vector<8x128xf32>
    %278 = arith.mulf %265, %277 : vector<8x128xf32>
    %279 = arith.addf %274, %278 : vector<8x128xf32>
    %280 = math.tanh %279 : vector<8x128xf32>
    %cst_90 = arith.constant 1.000000e+00 : f32
    %281 = vector.broadcast %cst_90 : f32 to vector<8x128xf32>
    %282 = arith.subf %281, %273 : vector<8x128xf32>
    %283 = arith.mulf %282, %280 : vector<8x128xf32>
    %284 = arith.mulf %273, %246 : vector<8x128xf32>
    %285 = arith.addf %283, %284 : vector<8x128xf32>
    %c0_91 = arith.constant 0 : index
    %286 = arith.index_cast %253 : i32 to index
    %c0_92 = arith.constant 0 : index
    %c0_93 = arith.constant 0 : index
    %287 = vector.load %arg6[%c0_91, %286, %c0_92, %c0_93] : memref<1x8x8x128xf32, #tpu.memory_space<vmem>>, vector<1x1x8x128xf32>
    %288 = vector.shape_cast %287 : vector<1x1x8x128xf32> to vector<8x128xf32>
    %289 = vector.shape_cast %285 : vector<8x128xf32> to vector<1x1x8x128xf32>
    tpu.vector_store %arg6[%c0_91, %286, %c0_92, %c0_93], %289 {strides = array<i32>} : memref<1x8x8x128xf32, #tpu.memory_space<vmem>>, vector<1x1x8x128xf32>,
    %c7_i32_94 = arith.constant 7 : i32
    %c0_i32_95 = arith.constant 0 : i32
    %290 = arith.cmpi eq, %arg0, %c0_i32_95 : i32
    %c7_i32_96 = arith.constant 7 : i32
    %291 = arith.subi %c7_i32_96, %c7_i32_94 : i32
    %292 = arith.select %290, %c7_i32_94, %291 : i32
    %293 = arith.index_cast %292 : i32 to index
    %c0_97 = arith.constant 0 : index
    %c0_98 = arith.constant 0 : index
    %294 = vector.load %arg8[%293, %c0_97, %c0_98] : memref<8x8x384xf32, #tpu.memory_space<vmem>>, vector<1x8x384xf32>
    %295 = vector.shape_cast %294 : vector<1x8x384xf32> to vector<8x384xf32>
    %cst_99 = arith.constant dense<0.000000e+00> : vector<8x384xf32>
    %296 = tpu.matmul %285, %13, %cst_99 {dimension_numbers = #tpu.dot_dimension_numbers<[1], [0], [0], [1], [0, 0, 1, 1], [], []>} : vector<8x128xf32>, vector<128x384xf32>, vector<8x384xf32> -> vector<8x384xf32>
    %297 = vector.extract_strided_slice %295 {offsets = [0, 0], sizes = [8, 128], strides = [1, 1]} : vector<8x384xf32> to vector<8x128xf32>
    %298 = vector.extract_strided_slice %296 {offsets = [0, 0], sizes = [8, 128], strides = [1, 1]} : vector<8x384xf32> to vector<8x128xf32>
    %299 = arith.addf %297, %298 : vector<8x128xf32>
    %300 = arith.negf %299 : vector<8x128xf32>
    %301 = math.exp %300 : vector<8x128xf32>
    %cst_100 = arith.constant 1.000000e+00 : f32
    %302 = vector.broadcast %cst_100 : f32 to vector<8x128xf32>
    %303 = arith.addf %302, %301 : vector<8x128xf32>
    %304 = arith.divf %302, %303 : vector<8x128xf32>
    %305 = vector.extract_strided_slice %295 {offsets = [0, 128], sizes = [8, 128], strides = [1, 1]} : vector<8x384xf32> to vector<8x128xf32>
    %306 = vector.extract_strided_slice %296 {offsets = [0, 128], sizes = [8, 128], strides = [1, 1]} : vector<8x384xf32> to vector<8x128xf32>
    %307 = arith.addf %305, %306 : vector<8x128xf32>
    %308 = arith.negf %307 : vector<8x128xf32>
    %309 = math.exp %308 : vector<8x128xf32>
    %cst_101 = arith.constant 1.000000e+00 : f32
    %310 = vector.broadcast %cst_101 : f32 to vector<8x128xf32>
    %311 = arith.addf %310, %309 : vector<8x128xf32>
    %312 = arith.divf %310, %311 : vector<8x128xf32>
    %313 = vector.extract_strided_slice %295 {offsets = [0, 256], sizes = [8, 128], strides = [1, 1]} : vector<8x384xf32> to vector<8x128xf32>
    %314 = vector.extract_strided_slice %296 {offsets = [0, 256], sizes = [8, 128], strides = [1, 1]} : vector<8x384xf32> to vector<8x128xf32>
    %315 = vector.broadcast %15 : vector<1x128xf32> to vector<8x128xf32>
    %316 = arith.addf %314, %315 : vector<8x128xf32>
    %317 = arith.mulf %304, %316 : vector<8x128xf32>
    %318 = arith.addf %313, %317 : vector<8x128xf32>
    %319 = math.tanh %318 : vector<8x128xf32>
    %cst_102 = arith.constant 1.000000e+00 : f32
    %320 = vector.broadcast %cst_102 : f32 to vector<8x128xf32>
    %321 = arith.subf %320, %312 : vector<8x128xf32>
    %322 = arith.mulf %321, %319 : vector<8x128xf32>
    %323 = arith.mulf %312, %285 : vector<8x128xf32>
    %324 = arith.addf %322, %323 : vector<8x128xf32>
    %c0_103 = arith.constant 0 : index
    %325 = arith.index_cast %292 : i32 to index
    %c0_104 = arith.constant 0 : index
    %c0_105 = arith.constant 0 : index
    %326 = vector.load %arg6[%c0_103, %325, %c0_104, %c0_105] : memref<1x8x8x128xf32, #tpu.memory_space<vmem>>, vector<1x1x8x128xf32>
    %327 = vector.shape_cast %326 : vector<1x1x8x128xf32> to vector<8x128xf32>
    %328 = vector.shape_cast %324 : vector<8x128xf32> to vector<1x1x8x128xf32>
    tpu.vector_store %arg6[%c0_103, %325, %c0_104, %c0_105], %328 {strides = array<i32>} : memref<1x8x8x128xf32, #tpu.memory_space<vmem>>, vector<1x1x8x128xf32>,
    %c8_i32 = arith.constant 8 : i32
    %c0_106 = arith.constant 0 : index
    %c0_107 = arith.constant 0 : index
    %c0_108 = arith.constant 0 : index
    %329 = vector.load %arg7[%c0_106, %c0_107, %c0_108] : memref<1x8x128xf32, #tpu.memory_space<vmem>>, vector<1x8x128xf32>
    %330 = vector.shape_cast %329 : vector<1x8x128xf32> to vector<8x128xf32>
    %331 = vector.shape_cast %324 : vector<8x128xf32> to vector<1x8x128xf32>
    tpu.vector_store %arg7[%c0_106, %c0_107, %c0_108], %331 {strides = array<i32>} : memref<1x8x128xf32, #tpu.memory_space<vmem>>, vector<1x8x128xf32>,
    return
  }
  func.func @transform_0(%arg0: i32) -> (i32, i32, i32) {
    %c0_i32 = arith.constant 0 : i32
    %c0_i32_0 = arith.constant 0 : i32
    %c0_i32_1 = arith.constant 0 : i32
    %c0_i32_2 = arith.constant 0 : i32
    return %c0_i32, %c0_i32_0, %c0_i32_1 : i32, i32, i32
  }
  func.func @transform_1(%arg0: i32) -> (i32, i32, i32) {
    %c0_i32 = arith.constant 0 : i32
    %c0_i32_0 = arith.constant 0 : i32
    %c0_i32_1 = arith.constant 0 : i32
    return %arg0, %c0_i32, %c0_i32_0 : i32, i32, i32
  }
  func.func @transform_2(%arg0: i32) -> (i32, i32, i32) {
    %c0_i32 = arith.constant 0 : i32
    %c0_i32_0 = arith.constant 0 : i32
    %c0_i32_1 = arith.constant 0 : i32
    return %arg0, %c0_i32, %c0_i32_0 : i32, i32, i32
  }
  func.func @transform_3(%arg0: i32) -> (i32, i32, i32) {
    %c0_i32 = arith.constant 0 : i32
    %c0_i32_0 = arith.constant 0 : i32
    %c0_i32_1 = arith.constant 0 : i32
    return %arg0, %c0_i32, %c0_i32_0 : i32, i32, i32
  }
  func.func @transform_4(%arg0: i32) -> (i32, i32, i32) {
    %c0_i32 = arith.constant 0 : i32
    %c0_i32_0 = arith.constant 0 : i32
    %c0_i32_1 = arith.constant 0 : i32
    return %arg0, %c0_i32, %c0_i32_0 : i32, i32, i32
  }
  func.func @transform_5(%arg0: i32) -> (i32, i32, i32, i32) {
    %c0_i32 = arith.constant 0 : i32
    %c0_i32_0 = arith.constant 0 : i32
    %c0_i32_1 = arith.constant 0 : i32
    %c0_i32_2 = arith.constant 0 : i32
    return %arg0, %c0_i32, %c0_i32_0, %c0_i32_1 : i32, i32, i32, i32
  }
  func.func @transform_6(%arg0: i32) -> (i32, i32, i32) {
    %c0_i32 = arith.constant 0 : i32
    %c0_i32_0 = arith.constant 0 : i32
    %c0_i32_1 = arith.constant 0 : i32
    return %arg0, %c0_i32, %c0_i32_0 : i32, i32, i32
  }
}

</mosaic_0001>

<llo_original>
// kernel: encoder_forward.1
$region0: #{encoder_forward.1}
  #allocation0 [shape = 'u32[]', space=smem, size = 0x4, offset = 0x4, fixed_abs, tag = 'smem constant byte address 0x4 - core index']
  #allocation1 [shape = 'u32[144,128]{1,0:T(1,128)}', space=vmem, size = 0x12000, scoped, tag = 'internal scratch']
  #allocation2 [shape = 'f32[8,8,384]{2,1,0:T(8,128)}', space=vmem, size = 0x18000, scoped, tag = 'scratch operand']
  %s0 = inlined_call_operand.vmem [shape: f32[8,8,32], index: 0, kind: input, shape index: {}]
  %s1 = inlined_call_operand.vmem [shape: f32[2,32,384], index: 1, kind: input, shape index: {}]
  %s2 = inlined_call_operand.vmem [shape: f32[2,1,384], index: 2, kind: input, shape index: {}]
  %s3 = inlined_call_operand.vmem [shape: f32[2,128,384], index: 3, kind: input, shape index: {}]
  %s4 = inlined_call_operand.vmem [shape: f32[2,1,128], index: 4, kind: input, shape index: {}]
  %s5 = inlined_call_operand.vmem [shape: f32[2,8,8,128], index: 5, kind: output, shape index: {0}]
  %s6 = inlined_call_operand.vmem [shape: f32[2,8,128], index: 6, kind: output, shape index: {1}]
  %7 = xla_tuple %s5, %s6
  %s8 = sld [smem:[#allocation0]]
  $region61: #{encoder_forward.1} parent=0
    _
  %s10 = ssub.s32 1, %s8
  %s11 = scalar_select 0, %s10, %s8
  loop: start=0, step=1, limit=4
  $region2: #{encoder_forward.1} parent=0 // loop_pre_header
    _
  $region3: #{encoder_forward.1} parent=0 // loop_header
    %s13 = sphi 0, %s17
    %p14 = scmp.ge.s32.totalorder %s13, 4
    %s21 = sphi 0, %s21
    %s23 = sphi 0, %s21
    %s24 = sphi 0, %s23
    %s38 = sphi 0, %s24
    %s44 = sphi 0, %s46
    %s47 = sphi 0, %s44
    %s48 = sphi 0, %s47
    %s64 = sphi 0, %s48
    %s70 = sphi 0, %s72
    %s73 = sphi 0, %s70
    %s74 = sphi 0, %s73
    %s90 = sphi 0, %s74
    %s96 = sphi 0, %s98
    %s99 = sphi 0, %s96
    %s100 = sphi 0, %s99
    %s116 = sphi 0, %s100
    %s122 = sphi 0, %s124
    %s125 = sphi 0, %s122
    %s126 = sphi 0, %s125
    %s142 = sphi 0, %s126
    %s148 = sphi 0, %s150
    %s151 = sphi 0, %s148
    %s152 = sphi 0, %s151
    %s168 = sphi 0, %s152
    %s174 = sphi 0, %s176
    %s177 = sphi 0, %s174
    %s178 = sphi 0, %s177
    %s194 = sphi 0, %s178
  $region4: #{encoder_forward.1} parent=0 // loop_header_branch
    %16 = sbr.rel (%p14) target = $region8
  $region5: #{encoder_forward.1} parent=0 // loop_body
    %s18 = ssub.s32 %s13, 1
    %s19 = ssub.s32 %s13, 2
    %s20 = sadd.s32 %s13, 1
    %s22 = sadd.s32 %s21, 1
    %p25 = scmp.eq.s32.totalorder %s13, 1
    %p26 = scmp.ne.s32.totalorder %s21, %s23
    %p27 = scmp.eq.s32.totalorder %s13, 0
    %p28 = por %p26, %p27
    %p29 = scmp.ne.s32.totalorder %s21, %s23
    %p30 = scmp.eq.s32.totalorder %s18, 1
    %p31 = por %p29, %p30
    %p32 = scmp.ne.s32.totalorder %s23, %s24
    %p33 = scmp.eq.s32.totalorder %s18, 0
    %p34 = por %p32, %p33
    %p35 = scmp.ne.s32.totalorder %s23, %s24
    %p36 = scmp.eq.s32.totalorder %s19, 1
    %p37 = por %p35, %p36
    %p39 = scmp.ne.s32.totalorder %s24, %s38
    %p40 = scmp.eq.s32.totalorder %s19, 0
    %p41 = por %p39, %p40
    %s42 = ssub.s32 %s13, %s20
    %p43 = scmp.eq.s32.totalorder %s42, 0
    %s45 = sadd.s32 %s44, 1
    %s46 = scalar_select %p43, %s44, %s45
    %p49 = pneg %p43
    %p50 = scmp.eq.s32.totalorder %s13, 1
    %p51 = por %p49, %p50
    %p52 = scmp.ne.s32.totalorder %s44, %s47
    %p53 = scmp.eq.s32.totalorder %s13, 0
    %p54 = por %p52, %p53
    %p55 = scmp.ne.s32.totalorder %s44, %s47
    %p56 = scmp.eq.s32.totalorder %s18, 1
    %p57 = por %p55, %p56
    %p58 = scmp.ne.s32.totalorder %s47, %s48
    %p59 = scmp.eq.s32.totalorder %s18, 0
    %p60 = por %p58, %p59
    %p61 = scmp.ne.s32.totalorder %s47, %s48
    %p62 = scmp.eq.s32.totalorder %s19, 1
    %p63 = por %p61, %p62
    %p65 = scmp.ne.s32.totalorder %s48, %s64
    %p66 = scmp.eq.s32.totalorder %s19, 0
    %p67 = por %p65, %p66
    %s68 = ssub.s32 %s13, %s20
    %p69 = scmp.eq.s32.totalorder %s68, 0
    %s71 = sadd.s32 %s70, 1
    %s72 = scalar_select %p69, %s70, %s71
    %p75 = pneg %p69
    %p76 = scmp.eq.s32.totalorder %s13, 1
    %p77 = por %p75, %p76
    %p78 = scmp.ne.s32.totalorder %s70, %s73
    %p79 = scmp.eq.s32.totalorder %s13, 0
    %p80 = por %p78, %p79
    %p81 = scmp.ne.s32.totalorder %s70, %s73
    %p82 = scmp.eq.s32.totalorder %s18, 1
    %p83 = por %p81, %p82
    %p84 = scmp.ne.s32.totalorder %s73, %s74
    %p85 = scmp.eq.s32.totalorder %s18, 0
    %p86 = por %p84, %p85
    %p87 = scmp.ne.s32.totalorder %s73, %s74
    %p88 = scmp.eq.s32.totalorder %s19, 1
    %p89 = por %p87, %p88
    %p91 = scmp.ne.s32.totalorder %s74, %s90
    %p92 = scmp.eq.s32.totalorder %s19, 0
    %p93 = por %p91, %p92
    %s94 = ssub.s32 %s13, %s20
    %p95 = scmp.eq.s32.totalorder %s94, 0
    %s97 = sadd.s32 %s96, 1
    %s98 = scalar_select %p95, %s96, %s97
    %p101 = pneg %p95
    %p102 = scmp.eq.s32.totalorder %s13, 1
    %p103 = por %p101, %p102
    %p104 = scmp.ne.s32.totalorder %s96, %s99
    %p105 = scmp.eq.s32.totalorder %s13, 0
    %p106 = por %p104, %p105
    %p107 = scmp.ne.s32.totalorder %s96, %s99
    %p108 = scmp.eq.s32.totalorder %s18, 1
    %p109 = por %p107, %p108
    %p110 = scmp.ne.s32.totalorder %s99, %s100
    %p111 = scmp.eq.s32.totalorder %s18, 0
    %p112 = por %p110, %p111
    %p113 = scmp.ne.s32.totalorder %s99, %s100
    %p114 = scmp.eq.s32.totalorder %s19, 1
    %p115 = por %p113, %p114
    %p117 = scmp.ne.s32.totalorder %s100, %s116
    %p118 = scmp.eq.s32.totalorder %s19, 0
    %p119 = por %p117, %p118
    %s120 = ssub.s32 %s13, %s20
    %p121 = scmp.eq.s32.totalorder %s120, 0
    %s123 = sadd.s32 %s122, 1
    %s124 = scalar_select %p121, %s122, %s123
    %p127 = pneg %p121
    %p128 = scmp.eq.s32.totalorder %s13, 1
    %p129 = por %p127, %p128
    %p130 = scmp.ne.s32.totalorder %s122, %s125
    %p131 = scmp.eq.s32.totalorder %s13, 0
    %p132 = por %p130, %p131
    %p133 = scmp.ne.s32.totalorder %s122, %s125
    %p134 = scmp.eq.s32.totalorder %s18, 1
    %p135 = por %p133, %p134
    %p136 = scmp.ne.s32.totalorder %s125, %s126
    %p137 = scmp.eq.s32.totalorder %s18, 0
    %p138 = por %p136, %p137
    %p139 = scmp.ne.s32.totalorder %s125, %s126
    %p140 = scmp.eq.s32.totalorder %s19, 1
    %p141 = por %p139, %p140
    %p143 = scmp.ne.s32.totalorder %s126, %s142
    %p144 = scmp.eq.s32.totalorder %s19, 0
    %p145 = por %p143, %p144
    %s146 = ssub.s32 %s13, %s20
    %p147 = scmp.eq.s32.totalorder %s146, 0
    %s149 = sadd.s32 %s148, 1
    %s150 = scalar_select %p147, %s148, %s149
    %p153 = pneg %p147
    %p154 = scmp.eq.s32.totalorder %s13, 1
    %p155 = por %p153, %p154
    %p156 = scmp.ne.s32.totalorder %s148, %s151
    %p157 = scmp.eq.s32.totalorder %s13, 0
    %p158 = por %p156, %p157
    %p159 = scmp.ne.s32.totalorder %s148, %s151
    %p160 = scmp.eq.s32.totalorder %s18, 1
    %p161 = por %p159, %p160
    %p162 = scmp.ne.s32.totalorder %s151, %s152
    %p163 = scmp.eq.s32.totalorder %s18, 0
    %p164 = por %p162, %p163
    %p165 = scmp.ne.s32.totalorder %s151, %s152
    %p166 = scmp.eq.s32.totalorder %s19, 1
    %p167 = por %p165, %p166
    %p169 = scmp.ne.s32.totalorder %s152, %s168
    %p170 = scmp.eq.s32.totalorder %s19, 0
    %p171 = por %p169, %p170
    %s172 = ssub.s32 %s13, %s20
    %p173 = scmp.eq.s32.totalorder %s172, 0
    %s175 = sadd.s32 %s174, 1
    %s176 = scalar_select %p173, %s174, %s175
    %p179 = pneg %p173
    %p180 = scmp.eq.s32.totalorder %s13, 1
    %p181 = por %p179, %p180
    %p182 = scmp.ne.s32.totalorder %s174, %s177
    %p183 = scmp.eq.s32.totalorder %s13, 0
    %p184 = por %p182, %p183
    %p185 = scmp.ne.s32.totalorder %s174, %s177
    %p186 = scmp.eq.s32.totalorder %s18, 1
    %p187 = por %p185, %p186
    %p188 = scmp.ne.s32.totalorder %s177, %s178
    %p189 = scmp.eq.s32.totalorder %s18, 0
    %p190 = por %p188, %p189
    %p191 = scmp.ne.s32.totalorder %s177, %s178
    %p192 = scmp.eq.s32.totalorder %s19, 1
    %p193 = por %p191, %p192
    %p195 = scmp.ne.s32.totalorder %s178, %s194
    %p196 = scmp.eq.s32.totalorder %s19, 0
    %p197 = por %p195, %p196
    %p198 = scmp.le.s32.totalorder 1, %s13
    %p199 = scmp.lt.s32.totalorder %s13, 3
    %p200 = pnand %p198, %p199
    %p201 = pneg %p200
    // Predicated region
    $region9: #{encoder_forward.1} parent=5 // pred_check
      _
    $region10: #{encoder_forward.1} parent=5 // pred_check_branch
      %203 = sbr.rel (%p200) target = $region12
    $region11: #{encoder_forward.1} parent=5 // pred_region
      %s204 = ssub.s32 %s13, 1
      // Predicated region
      $region13: #{encoder_forward.1} parent=11 // pred_check
        %p205 = pneg %p34
      $region14: #{encoder_forward.1} parent=11 // pred_check_branch
        %207 = sbr.rel (%p205) target = $region16
      $region15: #{encoder_forward.1} parent=11 // pred_region
        _
      $region16: #{encoder_forward.1} parent=11 // pred_fallthru
        _
    $region12: #{encoder_forward.1} parent=5 // pred_fallthru
      _
    %p208 = scmp.lt.s32.totalorder %s13, 2
    // Predicated region
    $region17: #{encoder_forward.1} parent=5 // pred_check
      %p209 = pneg %p208
    $region18: #{encoder_forward.1} parent=5 // pred_check_branch
      %211 = sbr.rel (%p209) target = $region20
    $region19: #{encoder_forward.1} parent=5 // pred_region
      // Predicated region
      $region21: #{encoder_forward.1} parent=19 // pred_check
        %p212 = pneg %p54
      $region22: #{encoder_forward.1} parent=19 // pred_check_branch
        %214 = sbr.rel (%p212) target = $region24
      $region23: #{encoder_forward.1} parent=19 // pred_region
        %p215 = scmp.lt.s32.totalorder %s13, 1
        %s216 = scalar_select %p215, %s13, 1
        %s217 = smul.addr %s216, 12
        %s218 = smul.addr %s217, 8
        %s219 = scalar_lea.vmem %s1, %s218
      $region24: #{encoder_forward.1} parent=19 // pred_fallthru
        _
      // Predicated region
      $region25: #{encoder_forward.1} parent=19 // pred_check
        %p220 = pneg %p80
      $region26: #{encoder_forward.1} parent=19 // pred_check_branch
        %222 = sbr.rel (%p220) target = $region28
      $region27: #{encoder_forward.1} parent=19 // pred_region
        %p223 = scmp.lt.s32.totalorder %s13, 1
        %s224 = scalar_select %p223, %s13, 1
        %s225 = smul.addr %s224, 3
        %s226 = scalar_lea.vmem %s2, %s225
      $region28: #{encoder_forward.1} parent=19 // pred_fallthru
        _
      // Predicated region
      $region29: #{encoder_forward.1} parent=19 // pred_check
        %p227 = pneg %p106
      $region30: #{encoder_forward.1} parent=19 // pred_check_branch
        %229 = sbr.rel (%p227) target = $region32
      $region31: #{encoder_forward.1} parent=19 // pred_region
        %p230 = scmp.lt.s32.totalorder %s13, 1
        %s231 = scalar_select %p230, %s13, 1
        %s232 = smul.addr %s231, 48
        %s233 = smul.addr %s232, 8
        %s234 = scalar_lea.vmem %s3, %s233
      $region32: #{encoder_forward.1} parent=19 // pred_fallthru
        _
      // Predicated region
      $region33: #{encoder_forward.1} parent=19 // pred_check
        %p235 = pneg %p132
      $region34: #{encoder_forward.1} parent=19 // pred_check_branch
        %237 = sbr.rel (%p235) target = $region36
      $region35: #{encoder_forward.1} parent=19 // pred_region
        %p238 = scmp.lt.s32.totalorder %s13, 1
        %s239 = scalar_select %p238, %s13, 1
        %s240 = scalar_lea.vmem %s4, %s239
      $region36: #{encoder_forward.1} parent=19 // pred_fallthru
        _
    $region20: #{encoder_forward.1} parent=5 // pred_fallthru
      _
    %p241 = scmp.le.s32.totalorder 1, %s13
    %p242 = scmp.lt.s32.totalorder %s13, 3
    %p243 = pnand %p241, %p242
    %p244 = pneg %p243
    // Predicated region
    $region37: #{encoder_forward.1} parent=5 // pred_check
      _
    $region38: #{encoder_forward.1} parent=5 // pred_check_branch
      %246 = sbr.rel (%p243) target = $region40
    $region39: #{encoder_forward.1} parent=5 // pred_region
      %s247 = ssub.s32 %s13, 1
      %p248 = pneg %p34
      %p249 = pneg %p31
      %p250 = scmp.lt.s32.totalorder %s18, 1
      %s251 = scalar_select %p250, %s18, 1
      %s252 = smul.addr %s251, 12
      %s253 = smul.addr %s252, 8
      %s254 = scalar_lea.vmem %s1, %s253
      %p255 = pneg %p60
      %p256 = pneg %p57
      %p257 = scmp.lt.s32.totalorder %s18, 1
      %s258 = scalar_select %p257, %s18, 1
      %s259 = smul.addr %s258, 3
      %s260 = scalar_lea.vmem %s2, %s259
      %p261 = pneg %p86
      %p262 = pneg %p83
      %p263 = scmp.lt.s32.totalorder %s18, 1
      %s264 = scalar_select %p263, %s18, 1
      %s265 = smul.addr %s264, 48
      %s266 = smul.addr %s265, 8
      %s267 = scalar_lea.vmem %s3, %s266
      %p268 = pneg %p112
      %p269 = pneg %p109
      %p270 = scmp.lt.s32.totalorder %s18, 1
      %s271 = scalar_select %p270, %s18, 1
      %s272 = scalar_lea.vmem %s4, %s271
      %p273 = pneg %p138
      %p274 = pneg %p135
      %p275 = pneg %p164
      %p276 = pneg %p161
      %p277 = scmp.lt.s32.totalorder %s18, 1
      %s278 = scalar_select %p277, %s18, 1
      %s279 = smul.addr %s278, 8
      %s280 = smul.addr %s279, 8
      %s281 = scalar_lea.vmem %s5, %s280
      %p282 = pneg %p190
      %p283 = pneg %p187
      %p284 = scmp.lt.s32.totalorder %s18, 1
      %s285 = scalar_select %p284, %s18, 1
      %s286 = smul.addr %s285, 8
      %s287 = scalar_lea.vmem %s6, %s286
      %p288 = scmp.lt.s32.totalorder %s18, 1
      %s289 = scalar_select %p288, %s18, 1
      %s290 = smul.addr %s289, 12
      %s291 = smul.addr %s290, 8
      %s292 = scalar_lea.vmem %s1, %s291
      %p293 = scmp.lt.s32.totalorder %s18, 1
      %s294 = scalar_select %p293, %s18, 1
      %s295 = smul.addr %s294, 3
      %s296 = scalar_lea.vmem %s2, %s295
      %p297 = scmp.lt.s32.totalorder %s18, 1
      %s298 = scalar_select %p297, %s18, 1
      %s299 = smul.addr %s298, 48
      %s300 = smul.addr %s299, 8
      %s301 = scalar_lea.vmem %s3, %s300
      %p302 = scmp.lt.s32.totalorder %s18, 1
      %s303 = scalar_select %p302, %s18, 1
      %s304 = scalar_lea.vmem %s4, %s303
      %p305 = scmp.lt.s32.totalorder %s18, 1
      %s306 = scalar_select %p305, %s18, 1
      %s307 = smul.addr %s306, 8
      %s308 = smul.addr %s307, 8
      %s309 = scalar_lea.vmem %s5, %s308
      %p310 = scmp.lt.s32.totalorder %s18, 1
      %s311 = scalar_select %p310, %s18, 1
      %s312 = smul.addr %s311, 8
      %s313 = scalar_lea.vmem %s6, %s312
      %v314 = vld [vmem:[%s0] sm:$0xff]
      %v315 = vld [vmem:[%s0 + $0x8] sm:$0xff]
      %v316 = vld [vmem:[%s0 + $0x10] sm:$0xff]
      %v317 = vld [vmem:[%s0 + $0x18] sm:$0xff]
      %v318 = vld [vmem:[%s0 + $0x20] sm:$0xff]
      %v319 = vld [vmem:[%s0 + $0x28] sm:$0xff]
      %v320 = vld [vmem:[%s0 + $0x30] sm:$0xff]
      %v321 = vld [vmem:[%s0 + $0x38] sm:$0xff]
      %v322 = vld [vmem:[%s292] sm:$0xff]
      %v323 = vld [vmem:[%s292 + $0x8] sm:$0xff]
      %v324 = vld [vmem:[%s292 + $0x10] sm:$0xff]
      %v325 = vld [vmem:[%s292 + $0x18] sm:$0xff]
      %v326 = vld [vmem:[%s292 + $0x20] sm:$0xff]
      %v327 = vld [vmem:[%s292 + $0x28] sm:$0xff]
      %v328 = vld [vmem:[%s292 + $0x30] sm:$0xff]
      %v329 = vld [vmem:[%s292 + $0x38] sm:$0xff]
      %v330 = vld [vmem:[%s292 + $0x40] sm:$0xff]
      %v331 = vld [vmem:[%s292 + $0x48] sm:$0xff]
      %v332 = vld [vmem:[%s292 + $0x50] sm:$0xff]
      %v333 = vld [vmem:[%s292 + $0x58] sm:$0xff]
      %vm334 = vcmask 261120
      %v336 = vsel %vm334, %v314, 0
      %v339 = vsel %vm334, %v315, 0
      %v342 = vsel %vm334, %v316, 0
      %v345 = vsel %vm334, %v317, 0
      %v348 = vsel %vm334, %v318, 0
      %v351 = vsel %vm334, %v319, 0
      %v354 = vsel %vm334, %v320, 0
      %v357 = vsel %vm334, %v321, 0
      %359 = vmatprep.subr.mxu0 0.0
      %360 = vmatpush1.msra.mxu0 0.0
      %361 = vmatprep.subr.mxu0 0.0
      %362 = vmatpush1.msra.mxu0 0.0
      %363 = vmatprep.subr.mxu0 0.0
      %364 = vmatpush1.msra.mxu0 0.0
      %365 = vmatprep.subr.mxu0 0.0
      %366 = vmatpush1.msra.mxu0 0.0
      %367 = vmatprep.subr.mxu0 0.0
      %368 = vmatpush1.msra.mxu0 0.0
      %369 = vmatprep.subr.mxu0 0.0
      %370 = vmatpush1.msra.mxu0 0.0
      %371 = vmatprep.subr.mxu0 0.0
      %372 = vmatpush1.msra.mxu0 0.0
      %373 = vmatprep.subr.mxu0 0.0
      %374 = vmatpush1.msra.mxu0 0.0
      %375 = vmatprep.subr.mxu0 0.0
      %376 = vmatpush1.msra.mxu0 0.0
      %377 = vmatprep.subr.mxu0 0.0
      %378 = vmatpush1.msra.mxu0 0.0
      %379 = vmatprep.subr.mxu0 0.0
      %380 = vmatpush1.msra.mxu0 0.0
      %381 = vmatprep.subr.mxu0 0.0
      %382 = vmatpush1.msra.mxu0 0.0
      %383 = vmatprep.subr.mxu0 %v332
      %384 = vmatpush1.msra.mxu0 %v331
      %385 = vmatprep.subr.mxu0 %v329
      %386 = vmatpush1.msra.mxu0 %v328
      %387 = vmatprep.subr.mxu0 %v326
      %388 = vmatpush1.msra.mxu0 %v325
      %389 = vmatprep.subr.mxu0 %v323
      %390 = vmatpush1.msra.mxu0 %v322
      %391 = vmatprep.subr.mxu0 0.0
      %392 = vmatpush2.msra.mxu0 0.0
      %393 = vmatprep.subr.mxu0 0.0
      %394 = vmatpush2.msra.mxu0 0.0
      %395 = vmatprep.subr.mxu0 0.0
      %396 = vmatpush2.msra.mxu0 0.0
      %397 = vmatprep.subr.mxu0 0.0
      %398 = vmatpush2.msra.mxu0 0.0
      %399 = vmatprep.subr.mxu0 0.0
      %400 = vmatpush2.msra.mxu0 0.0
      %401 = vmatprep.subr.mxu0 0.0
      %402 = vmatpush2.msra.mxu0 0.0
      %403 = vmatprep.subr.mxu0 0.0
      %404 = vmatpush2.msra.mxu0 0.0
      %405 = vmatprep.subr.mxu0 0.0
      %406 = vmatpush2.msra.mxu0 0.0
      %407 = vmatprep.subr.mxu0 0.0
      %408 = vmatpush2.msra.mxu0 0.0
      %409 = vmatprep.subr.mxu0 0.0
      %410 = vmatpush2.msra.mxu0 0.0
      %411 = vmatprep.subr.mxu0 0.0
      %412 = vmatpush2.msra.mxu0 0.0
      %413 = vmatprep.subr.mxu0 0.0
      %414 = vmatpush2.msra.mxu0 0.0
      %415 = vmatprep.subr.mxu0 0.0
      %416 = vmatpush2.msra.mxu0 0.0
      %417 = vmatprep.subr.mxu0 0.0
      %418 = vmatpush2.msra.mxu0 0.0
      %419 = vmatprep.subr.mxu0 0.0
      %420 = vmatpush2.msra.mxu0 0.0
      %421 = vmatprep.subr.mxu0 0.0
      %422 = vmatpush2.msra.mxu0 0.0
      %423 = vmatprep.mubr.f32.mxu0 0.0
      %424 = vmatmul.mubr.f32.gmra.mxu0 %v336
      %v425 = vpop.f32.mrf.mxu0
      %v426 = vadd.f32 0.0, %v425
      %v427 = vpop.f32.mrf.mxu0
      %v428 = vadd.f32 0.0, %v427
      %429 = vmatprep.mubr.f32.mxu0 0.0
      %430 = vmatmul.mubr.f32.gmra.mxu0 %v339
      %v431 = vpop.f32.mrf.mxu0
      %v432 = vadd.f32 0.0, %v431
      %v433 = vpop.f32.mrf.mxu0
      %v434 = vadd.f32 0.0, %v433
      %435 = vmatprep.mubr.f32.mxu0 0.0
      %436 = vmatmul.mubr.f32.gmra.mxu0 %v342
      %v437 = vpop.f32.mrf.mxu0
      %v438 = vadd.f32 0.0, %v437
      %v439 = vpop.f32.mrf.mxu0
      %v440 = vadd.f32 0.0, %v439
      %441 = vmatprep.mubr.f32.mxu0 0.0
      %442 = vmatmul.mubr.f32.gmra.mxu0 %v345
      %v443 = vpop.f32.mrf.mxu0
      %v444 = vadd.f32 0.0, %v443
      %v445 = vpop.f32.mrf.mxu0
      %v446 = vadd.f32 0.0, %v445
      %447 = vmatprep.mubr.f32.mxu0 0.0
      %448 = vmatmul.mubr.f32.gmra.mxu0 %v348
      %v449 = vpop.f32.mrf.mxu0
      %v450 = vadd.f32 0.0, %v449
      %v451 = vpop.f32.mrf.mxu0
      %v452 = vadd.f32 0.0, %v451
      %453 = vmatprep.mubr.f32.mxu0 0.0
      %454 = vmatmul.mubr.f32.gmra.mxu0 %v351
      %v455 = vpop.f32.mrf.mxu0
      %v456 = vadd.f32 0.0, %v455
      %v457 = vpop.f32.mrf.mxu0
      %v458 = vadd.f32 0.0, %v457
      %459 = vmatprep.mubr.f32.mxu0 0.0
      %460 = vmatmul.mubr.f32.gmra.mxu0 %v354
      %v461 = vpop.f32.mrf.mxu0
      %v462 = vadd.f32 0.0, %v461
      %v463 = vpop.f32.mrf.mxu0
      %v464 = vadd.f32 0.0, %v463
      %465 = vmatprep.mubr.f32.mxu0 0.0
      %466 = vmatmul.mubr.f32.gmra.mxu0 %v357
      %v467 = vpop.f32.mrf.mxu0
      %v468 = vadd.f32 0.0, %v467
      %v469 = vpop.f32.mrf.mxu0
      %v470 = vadd.f32 0.0, %v469
      %471 = vdwg.mxu0
      %472 = vmatprep.subr.mxu0 0.0
      %473 = vmatpush1.msra.mxu0 0.0
      %474 = vmatprep.subr.mxu0 0.0
      %475 = vmatpush1.msra.mxu0 0.0
      %476 = vmatprep.subr.mxu0 0.0
      %477 = vmatpush1.msra.mxu0 0.0
      %478 = vmatprep.subr.mxu0 0.0
      %479 = vmatpush1.msra.mxu0 0.0
      %480 = vmatprep.subr.mxu0 0.0
      %481 = vmatpush1.msra.mxu0 0.0
      %482 = vmatprep.subr.mxu0 0.0
      %483 = vmatpush1.msra.mxu0 0.0
      %484 = vmatprep.subr.mxu0 0.0
      %485 = vmatpush1.msra.mxu0 0.0
      %486 = vmatprep.subr.mxu0 0.0
      %487 = vmatpush1.msra.mxu0 0.0
      %488 = vmatprep.subr.mxu0 0.0
      %489 = vmatpush1.msra.mxu0 0.0
      %490 = vmatprep.subr.mxu0 0.0
      %491 = vmatpush1.msra.mxu0 0.0
      %492 = vmatprep.subr.mxu0 0.0
      %493 = vmatpush1.msra.mxu0 0.0
      %494 = vmatprep.subr.mxu0 0.0
      %495 = vmatpush1.msra.mxu0 0.0
      %496 = vmatprep.subr.mxu0 0.0
      %497 = vmatpush1.msra.mxu0 %v333
      %498 = vmatprep.subr.mxu0 0.0
      %499 = vmatpush1.msra.mxu0 %v330
      %500 = vmatprep.subr.mxu0 0.0
      %501 = vmatpush1.msra.mxu0 %v327
      %502 = vmatprep.subr.mxu0 0.0
      %503 = vmatpush1.msra.mxu0 %v324
      %504 = vmatprep.subr.mxu0 0.0
      %505 = vmatpush2.msra.mxu0 0.0
      %506 = vmatprep.subr.mxu0 0.0
      %507 = vmatpush2.msra.mxu0 0.0
      %508 = vmatprep.subr.mxu0 0.0
      %509 = vmatpush2.msra.mxu0 0.0
      %510 = vmatprep.subr.mxu0 0.0
      %511 = vmatpush2.msra.mxu0 0.0
      %512 = vmatprep.subr.mxu0 0.0
      %513 = vmatpush2.msra.mxu0 0.0
      %514 = vmatprep.subr.mxu0 0.0
      %515 = vmatpush2.msra.mxu0 0.0
      %516 = vmatprep.subr.mxu0 0.0
      %517 = vmatpush2.msra.mxu0 0.0
      %518 = vmatprep.subr.mxu0 0.0
      %519 = vmatpush2.msra.mxu0 0.0
      %520 = vmatprep.subr.mxu0 0.0
      %521 = vmatpush2.msra.mxu0 0.0
      %522 = vmatprep.subr.mxu0 0.0
      %523 = vmatpush2.msra.mxu0 0.0
      %524 = vmatprep.subr.mxu0 0.0
      %525 = vmatpush2.msra.mxu0 0.0
      %526 = vmatprep.subr.mxu0 0.0
      %527 = vmatpush2.msra.mxu0 0.0
      %528 = vmatprep.subr.mxu0 0.0
      %529 = vmatpush2.msra.mxu0 0.0
      %530 = vmatprep.subr.mxu0 0.0
      %531 = vmatpush2.msra.mxu0 0.0
      %532 = vmatprep.subr.mxu0 0.0
      %533 = vmatpush2.msra.mxu0 0.0
      %534 = vmatprep.subr.mxu0 0.0
      %535 = vmatpush2.msra.mxu0 0.0
      %536 = vmatprep.mubr.f32.mxu0 0.0
      %537 = vmatmul.mubr.f32.gmra.mxu0 %v336
      %v538 = vpop.f32.mrf.mxu0
      %v539 = vadd.f32 0.0, %v538
      %v540 = vpop.f32.mrf.mxu0
      %541 = vmatprep.mubr.f32.mxu0 0.0
      %542 = vmatmul.mubr.f32.gmra.mxu0 %v339
      %v543 = vpop.f32.mrf.mxu0
      %v544 = vadd.f32 0.0, %v543
      %v545 = vpop.f32.mrf.mxu0
      %546 = vmatprep.mubr.f32.mxu0 0.0
      %547 = vmatmul.mubr.f32.gmra.mxu0 %v342
      %v548 = vpop.f32.mrf.mxu0
      %v549 = vadd.f32 0.0, %v548
      %v550 = vpop.f32.mrf.mxu0
      %551 = vmatprep.mubr.f32.mxu0 0.0
      %552 = vmatmul.mubr.f32.gmra.mxu0 %v345
      %v553 = vpop.f32.mrf.mxu0
      %v554 = vadd.f32 0.0, %v553
      %v555 = vpop.f32.mrf.mxu0
      %556 = vmatprep.mubr.f32.mxu0 0.0
      %557 = vmatmul.mubr.f32.gmra.mxu0 %v348
      %v558 = vpop.f32.mrf.mxu0
      %v559 = vadd.f32 0.0, %v558
      %v560 = vpop.f32.mrf.mxu0
      %561 = vmatprep.mubr.f32.mxu0 0.0
      %562 = vmatmul.mubr.f32.gmra.mxu0 %v351
      %v563 = vpop.f32.mrf.mxu0
      %v564 = vadd.f32 0.0, %v563
      %v565 = vpop.f32.mrf.mxu0
      %566 = vmatprep.mubr.f32.mxu0 0.0
      %567 = vmatmul.mubr.f32.gmra.mxu0 %v354
      %v568 = vpop.f32.mrf.mxu0
      %v569 = vadd.f32 0.0, %v568
      %v570 = vpop.f32.mrf.mxu0
      %571 = vmatprep.mubr.f32.mxu0 0.0
      %572 = vmatmul.mubr.f32.gmra.mxu0 %v357
      %v573 = vpop.f32.mrf.mxu0
      %v574 = vadd.f32 0.0, %v573
      %v575 = vpop.f32.mrf.mxu0
      %576 = vdwg.mxu0
      %v577 = vld [vmem:[%s296] sm:$0x7]
      %v579 = vlaneseq
      %v580 = vshrl.u32 %v579, 7
      %v581 = vsub.s32 0, %v580
      %v582 = vrot.slane %v577, %v581
      %v583 = vlaneseq
      %v584 = vshrl.u32 %v583, 7
      %v585 = vsub.s32 1, %v584
      %v586 = vrot.slane %v577, %v585
      %v587 = vlaneseq
      %v588 = vshrl.u32 %v587, 7
      %v589 = vsub.s32 2, %v588
      %v590 = vrot.slane %v577, %v589
      %v594 = vadd.f32 %v426, %v582
      %v595 = vadd.f32 %v428, %v586
      %v596 = vadd.f32 %v539, %v590
      %v597 = vadd.f32 %v432, %v582
      %v598 = vadd.f32 %v434, %v586
      %v599 = vadd.f32 %v544, %v590
      %v600 = vadd.f32 %v438, %v582
      %v601 = vadd.f32 %v440, %v586
      %v602 = vadd.f32 %v549, %v590
      %v603 = vadd.f32 %v444, %v582
      %v604 = vadd.f32 %v446, %v586
      %v605 = vadd.f32 %v554, %v590
      %v606 = vadd.f32 %v450, %v582
      %v607 = vadd.f32 %v452, %v586
      %v608 = vadd.f32 %v559, %v590
      %v609 = vadd.f32 %v456, %v582
      %v610 = vadd.f32 %v458, %v586
      %v611 = vadd.f32 %v564, %v590
      %v612 = vadd.f32 %v462, %v582
      %v613 = vadd.f32 %v464, %v586
      %v614 = vadd.f32 %v569, %v590
      %v615 = vadd.f32 %v468, %v582
      %v616 = vadd.f32 %v470, %v586
      %v617 = vadd.f32 %v574, %v590
      %618 = vst [vmem:[#allocation2] sm:$0xff] %v594
      %619 = vst [vmem:[#allocation2 + $0x8] sm:$0xff] %v595
      %620 = vst [vmem:[#allocation2 + $0x10] sm:$0xff] %v596
      %621 = vst [vmem:[#allocation2 + $0x18] sm:$0xff] %v597
      %622 = vst [vmem:[#allocation2 + $0x20] sm:$0xff] %v598
      %623 = vst [vmem:[#allocation2 + $0x28] sm:$0xff] %v599
      %624 = vst [vmem:[#allocation2 + $0x30] sm:$0xff] %v600
      %625 = vst [vmem:[#allocation2 + $0x38] sm:$0xff] %v601
      %626 = vst [vmem:[#allocation2 + $0x40] sm:$0xff] %v602
      %627 = vst [vmem:[#allocation2 + $0x48] sm:$0xff] %v603
      %628 = vst [vmem:[#allocation2 + $0x50] sm:$0xff] %v604
      %629 = vst [vmem:[#allocation2 + $0x58] sm:$0xff] %v605
      %630 = vst [vmem:[#allocation2 + $0x60] sm:$0xff] %v606
      %631 = vst [vmem:[#allocation2 + $0x68] sm:$0xff] %v607
      %632 = vst [vmem:[#allocation2 + $0x70] sm:$0xff] %v608
      %633 = vst [vmem:[#allocation2 + $0x78] sm:$0xff] %v609
      %634 = vst [vmem:[#allocation2 + $0x80] sm:$0xff] %v610
      %635 = vst [vmem:[#allocation2 + $0x88] sm:$0xff] %v611
      %636 = vst [vmem:[#allocation2 + $0x90] sm:$0xff] %v612
      %637 = vst [vmem:[#allocation2 + $0x98] sm:$0xff] %v613
      %638 = vst [vmem:[#allocation2 + $0xa0] sm:$0xff] %v614
      %639 = vst [vmem:[#allocation2 + $0xa8] sm:$0xff] %v615
      %640 = vst [vmem:[#allocation2 + $0xb0] sm:$0xff] %v616
      %641 = vst [vmem:[#allocation2 + $0xb8] sm:$0xff] %v617
      %v642 = vld [vmem:[%s301] sm:$0xff]
      %v643 = vld [vmem:[%s301 + $0x8] sm:$0xff]
      %v644 = vld [vmem:[%s301 + $0x10] sm:$0xff]
      %v645 = vld [vmem:[%s301 + $0x18] sm:$0xff]
      %v646 = vld [vmem:[%s301 + $0x20] sm:$0xff]
      %v647 = vld [vmem:[%s301 + $0x28] sm:$0xff]
      %v648 = vld [vmem:[%s301 + $0x30] sm:$0xff]
      %v649 = vld [vmem:[%s301 + $0x38] sm:$0xff]
      %v650 = vld [vmem:[%s301 + $0x40] sm:$0xff]
      %v651 = vld [vmem:[%s301 + $0x48] sm:$0xff]
      %v652 = vld [vmem:[%s301 + $0x50] sm:$0xff]
      %v653 = vld [vmem:[%s301 + $0x58] sm:$0xff]
      %v654 = vld [vmem:[%s301 + $0x60] sm:$0xff]
      %v655 = vld [vmem:[%s301 + $0x68] sm:$0xff]
      %v656 = vld [vmem:[%s301 + $0x70] sm:$0xff]
      %v657 = vld [vmem:[%s301 + $0x78] sm:$0xff]
      %v658 = vld [vmem:[%s301 + $0x80] sm:$0xff]
      %v659 = vld [vmem:[%s301 + $0x88] sm:$0xff]
      %v660 = vld [vmem:[%s301 + $0x90] sm:$0xff]
      %v661 = vld [vmem:[%s301 + $0x98] sm:$0xff]
      %v662 = vld [vmem:[%s301 + $0xa0] sm:$0xff]
      %v663 = vld [vmem:[%s301 + $0xa8] sm:$0xff]
      %v664 = vld [vmem:[%s301 + $0xb0] sm:$0xff]
      %v665 = vld [vmem:[%s301 + $0xb8] sm:$0xff]
      %v666 = vld [vmem:[%s301 + $0xc0] sm:$0xff]
      %v667 = vld [vmem:[%s301 + $0xc8] sm:$0xff]
      %v668 = vld [vmem:[%s301 + $0xd0] sm:$0xff]
      %v669 = vld [vmem:[%s301 + $0xd8] sm:$0xff]
      %v670 = vld [vmem:[%s301 + $0xe0] sm:$0xff]
      %v671 = vld [vmem:[%s301 + $0xe8] sm:$0xff]
      %v672 = vld [vmem:[%s301 + $0xf0] sm:$0xff]
      %v673 = vld [vmem:[%s301 + $0xf8] sm:$0xff]
      %v674 = vld [vmem:[%s301 + $0x100] sm:$0xff]
      %v675 = vld [vmem:[%s301 + $0x108] sm:$0xff]
      %v676 = vld [vmem:[%s301 + $0x110] sm:$0xff]
      %v677 = vld [vmem:[%s301 + $0x118] sm:$0xff]
      %v678 = vld [vmem:[%s301 + $0x120] sm:$0xff]
      %v679 = vld [vmem:[%s301 + $0x128] sm:$0xff]
      %v680 = vld [vmem:[%s301 + $0x130] sm:$0xff]
      %v681 = vld [vmem:[%s301 + $0x138] sm:$0xff]
      %v682 = vld [vmem:[%s301 + $0x140] sm:$0xff]
      %v683 = vld [vmem:[%s301 + $0x148] sm:$0xff]
      %v684 = vld [vmem:[%s301 + $0x150] sm:$0xff]
      %v685 = vld [vmem:[%s301 + $0x158] sm:$0xff]
      %v686 = vld [vmem:[%s301 + $0x160] sm:$0xff]
      %v687 = vld [vmem:[%s301 + $0x168] sm:$0xff]
      %v688 = vld [vmem:[%s301 + $0x170] sm:$0xff]
      %v689 = vld [vmem:[%s301 + $0x178] sm:$0xff]
      %v690 = vld [vmem:[%s304] sm:$0x1]
      %p691 = scmp.eq.s32.totalorder %s18, 0
      %s692 = scalar_select %p691, 0, 7
      %s693 = smul.u32 %s692, 3
      %s694 = smul.addr %s693, 8
      %s695 = scalar_lea.vmem [#allocation2], %s694
      %v696 = vld [vmem:[%s695] sm:$0xff]
      %v697 = vld [vmem:[%s695 + $0x8] sm:$0xff]
      %v698 = vld [vmem:[%s695 + $0x10] sm:$0xff]
      %699 = vmatprep.subr.mxu0 %v688
      %700 = vmatpush1.msra.mxu0 %v687
      %701 = vmatprep.subr.mxu0 %v685
      %702 = vmatpush1.msra.mxu0 %v684
      %703 = vmatprep.subr.mxu0 %v682
      %704 = vmatpush1.msra.mxu0 %v681
      %705 = vmatprep.subr.mxu0 %v679
      %706 = vmatpush1.msra.mxu0 %v678
      %707 = vmatprep.subr.mxu0 %v676
      %708 = vmatpush1.msra.mxu0 %v675
      %709 = vmatprep.subr.mxu0 %v673
      %710 = vmatpush1.msra.mxu0 %v672
      %711 = vmatprep.subr.mxu0 %v670
      %712 = vmatpush1.msra.mxu0 %v669
      %713 = vmatprep.subr.mxu0 %v667
      %714 = vmatpush1.msra.mxu0 %v666
      %715 = vmatprep.subr.mxu0 %v664
      %716 = vmatpush1.msra.mxu0 %v663
      %717 = vmatprep.subr.mxu0 %v661
      %718 = vmatpush1.msra.mxu0 %v660
      %719 = vmatprep.subr.mxu0 %v658
      %720 = vmatpush1.msra.mxu0 %v657
      %721 = vmatprep.subr.mxu0 %v655
      %722 = vmatpush1.msra.mxu0 %v654
      %723 = vmatprep.subr.mxu0 %v652
      %724 = vmatpush1.msra.mxu0 %v651
      %725 = vmatprep.subr.mxu0 %v649
      %726 = vmatpush1.msra.mxu0 %v648
      %727 = vmatprep.subr.mxu0 %v646
      %728 = vmatpush1.msra.mxu0 %v645
      %729 = vmatprep.subr.mxu0 %v643
      %730 = vmatpush1.msra.mxu0 %v642
      %731 = vmatprep.subr.mxu0 0.0
      %732 = vmatpush2.msra.mxu0 0.0
      %733 = vmatprep.subr.mxu0 0.0
      %734 = vmatpush2.msra.mxu0 0.0
      %735 = vmatprep.subr.mxu0 0.0
      %736 = vmatpush2.msra.mxu0 0.0
      %737 = vmatprep.subr.mxu0 0.0
      %738 = vmatpush2.msra.mxu0 0.0
      %739 = vmatprep.subr.mxu0 0.0
      %740 = vmatpush2.msra.mxu0 0.0
      %741 = vmatprep.subr.mxu0 0.0
      %742 = vmatpush2.msra.mxu0 0.0
      %743 = vmatprep.subr.mxu0 0.0
      %744 = vmatpush2.msra.mxu0 0.0
      %745 = vmatprep.subr.mxu0 0.0
      %746 = vmatpush2.msra.mxu0 0.0
      %747 = vmatprep.subr.mxu0 0.0
      %748 = vmatpush2.msra.mxu0 0.0
      %749 = vmatprep.subr.mxu0 0.0
      %750 = vmatpush2.msra.mxu0 0.0
      %751 = vmatprep.subr.mxu0 0.0
      %752 = vmatpush2.msra.mxu0 0.0
      %753 = vmatprep.subr.mxu0 0.0
      %754 = vmatpush2.msra.mxu0 0.0
      %755 = vmatprep.subr.mxu0 0.0
      %756 = vmatpush2.msra.mxu0 0.0
      %757 = vmatprep.subr.mxu0 0.0
      %758 = vmatpush2.msra.mxu0 0.0
      %759 = vmatprep.subr.mxu0 0.0
      %760 = vmatpush2.msra.mxu0 0.0
      %761 = vmatprep.subr.mxu0 0.0
      %762 = vmatpush2.msra.mxu0 0.0
      %763 = vmatprep.mubr.f32.mxu0 0.0
      %764 = vmatmul.mubr.f32.gmra.mxu0 0.0
      %v765 = vpop.f32.mrf.mxu0
      %v766 = vadd.f32 0.0, %v765
      %v767 = vpop.f32.mrf.mxu0
      %v768 = vadd.f32 0.0, %v767
      %769 = vdwg.mxu0
      %770 = vmatprep.subr.mxu0 0.0
      %771 = vmatpush1.msra.mxu0 %v689
      %772 = vmatprep.subr.mxu0 0.0
      %773 = vmatpush1.msra.mxu0 %v686
      %774 = vmatprep.subr.mxu0 0.0
      %775 = vmatpush1.msra.mxu0 %v683
      %776 = vmatprep.subr.mxu0 0.0
      %777 = vmatpush1.msra.mxu0 %v680
      %778 = vmatprep.subr.mxu0 0.0
      %779 = vmatpush1.msra.mxu0 %v677
      %780 = vmatprep.subr.mxu0 0.0
      %781 = vmatpush1.msra.mxu0 %v674
      %782 = vmatprep.subr.mxu0 0.0
      %783 = vmatpush1.msra.mxu0 %v671
      %784 = vmatprep.subr.mxu0 0.0
      %785 = vmatpush1.msra.mxu0 %v668
      %786 = vmatprep.subr.mxu0 0.0
      %787 = vmatpush1.msra.mxu0 %v665
      %788 = vmatprep.subr.mxu0 0.0
      %789 = vmatpush1.msra.mxu0 %v662
      %790 = vmatprep.subr.mxu0 0.0
      %791 = vmatpush1.msra.mxu0 %v659
      %792 = vmatprep.subr.mxu0 0.0
      %793 = vmatpush1.msra.mxu0 %v656
      %794 = vmatprep.subr.mxu0 0.0
      %795 = vmatpush1.msra.mxu0 %v653
      %796 = vmatprep.subr.mxu0 0.0
      %797 = vmatpush1.msra.mxu0 %v650
      %798 = vmatprep.subr.mxu0 0.0
      %799 = vmatpush1.msra.mxu0 %v647
      %800 = vmatprep.subr.mxu0 0.0
      %801 = vmatpush1.msra.mxu0 %v644
      %802 = vmatprep.subr.mxu0 0.0
      %803 = vmatpush2.msra.mxu0 0.0
      %804 = vmatprep.subr.mxu0 0.0
      %805 = vmatpush2.msra.mxu0 0.0
      %806 = vmatprep.subr.mxu0 0.0
      %807 = vmatpush2.msra.mxu0 0.0
      %808 = vmatprep.subr.mxu0 0.0
      %809 = vmatpush2.msra.mxu0 0.0
      %810 = vmatprep.subr.mxu0 0.0
      %811 = vmatpush2.msra.mxu0 0.0
      %812 = vmatprep.subr.mxu0 0.0
      %813 = vmatpush2.msra.mxu0 0.0
      %814 = vmatprep.subr.mxu0 0.0
      %815 = vmatpush2.msra.mxu0 0.0
      %816 = vmatprep.subr.mxu0 0.0
      %817 = vmatpush2.msra.mxu0 0.0
      %818 = vmatprep.subr.mxu0 0.0
      %819 = vmatpush2.msra.mxu0 0.0
      %820 = vmatprep.subr.mxu0 0.0
      %821 = vmatpush2.msra.mxu0 0.0
      %822 = vmatprep.subr.mxu0 0.0
      %823 = vmatpush2.msra.mxu0 0.0
      %824 = vmatprep.subr.mxu0 0.0
      %825 = vmatpush2.msra.mxu0 0.0
      %826 = vmatprep.subr.mxu0 0.0
      %827 = vmatpush2.msra.mxu0 0.0
      %828 = vmatprep.subr.mxu0 0.0
      %829 = vmatpush2.msra.mxu0 0.0
      %830 = vmatprep.subr.mxu0 0.0
      %831 = vmatpush2.msra.mxu0 0.0
      %832 = vmatprep.subr.mxu0 0.0
      %833 = vmatpush2.msra.mxu0 0.0
      %834 = vmatprep.mubr.f32.mxu0 0.0
      %835 = vmatmul.mubr.f32.gmra.mxu0 0.0
      %v836 = vpop.f32.mrf.mxu0
      %v837 = vadd.f32 0.0, %v836
      %v838 = vpop.f32.mrf.mxu0
      %839 = vdwg.mxu0
      %v840 = vadd.f32 %v696, %v766
      %v841 = vxor.u32 %v840, 2147483648
      %v842 = vmul.f32 %v841, 1.442695
      %v843 = vpow.pop %v842
      %v844 = vadd.f32 %v843, 1.0
      %v845 = vrcp.pop %v844
      %v846 = vmul.f32 1.0, %v845
      %v847 = vadd.f32 %v697, %v768
      %v848 = vxor.u32 %v847, 2147483648
      %v849 = vmul.f32 %v848, 1.442695
      %v850 = vpow.pop %v849
      %v851 = vadd.f32 %v850, 1.0
      %v852 = vrcp.pop %v851
      %v853 = vmul.f32 1.0, %v852
      %v855 = vlaneseq
      %v856 = vshrl.u32 %v855, 7
      %v857 = vsub.s32 0, %v856
      %v858 = vrot.slane %v690, %v857
      %v860 = vadd.f32 %v837, %v858
      %v861 = vmul.f32 %v846, %v860
      %v862 = vadd.f32 %v698, %v861
      %v863 = vtanh.pop %v862
      %v864 = vsub.f32 1.0, %v853
      %v865 = vmul.f32 %v864, %v863
      %v866 = vmul.f32 %v853, 0.0
      %v867 = vadd.f32 %v865, %v866
      %s868 = smul.u32 %s692, 8
      %s869 = scalar_lea.vmem %s309, %s868
      %870 = vst [vmem:[%s869] sm:$0xff] %v867
      %s871 = scalar_select %p691, 1, 6
      %s872 = smul.u32 %s871, 3
      %s873 = smul.addr %s872, 8
      %s874 = scalar_lea.vmem [#allocation2], %s873
      %v875 = vld [vmem:[%s874] sm:$0xff]
      %v876 = vld [vmem:[%s874 + $0x8] sm:$0xff]
      %v877 = vld [vmem:[%s874 + $0x10] sm:$0xff]
      %878 = vmatprep.subr.mxu0 %v688
      %879 = vmatpush1.msra.mxu0 %v687
      %880 = vmatprep.subr.mxu0 %v685
      %881 = vmatpush1.msra.mxu0 %v684
      %882 = vmatprep.subr.mxu0 %v682
      %883 = vmatpush1.msra.mxu0 %v681
      %884 = vmatprep.subr.mxu0 %v679
      %885 = vmatpush1.msra.mxu0 %v678
      %886 = vmatprep.subr.mxu0 %v676
      %887 = vmatpush1.msra.mxu0 %v675
      %888 = vmatprep.subr.mxu0 %v673
      %889 = vmatpush1.msra.mxu0 %v672
      %890 = vmatprep.subr.mxu0 %v670
      %891 = vmatpush1.msra.mxu0 %v669
      %892 = vmatprep.subr.mxu0 %v667
      %893 = vmatpush1.msra.mxu0 %v666
      %894 = vmatprep.subr.mxu0 %v664
      %895 = vmatpush1.msra.mxu0 %v663
      %896 = vmatprep.subr.mxu0 %v661
      %897 = vmatpush1.msra.mxu0 %v660
      %898 = vmatprep.subr.mxu0 %v658
      %899 = vmatpush1.msra.mxu0 %v657
      %900 = vmatprep.subr.mxu0 %v655
      %901 = vmatpush1.msra.mxu0 %v654
      %902 = vmatprep.subr.mxu0 %v652
      %903 = vmatpush1.msra.mxu0 %v651
      %904 = vmatprep.subr.mxu0 %v649
      %905 = vmatpush1.msra.mxu0 %v648
      %906 = vmatprep.subr.mxu0 %v646
      %907 = vmatpush1.msra.mxu0 %v645
      %908 = vmatprep.subr.mxu0 %v643
      %909 = vmatpush1.msra.mxu0 %v642
      %910 = vmatprep.subr.mxu0 0.0
      %911 = vmatpush2.msra.mxu0 0.0
      %912 = vmatprep.subr.mxu0 0.0
      %913 = vmatpush2.msra.mxu0 0.0
      %914 = vmatprep.subr.mxu0 0.0
      %915 = vmatpush2.msra.mxu0 0.0
      %916 = vmatprep.subr.mxu0 0.0
      %917 = vmatpush2.msra.mxu0 0.0
      %918 = vmatprep.subr.mxu0 0.0
      %919 = vmatpush2.msra.mxu0 0.0
      %920 = vmatprep.subr.mxu0 0.0
      %921 = vmatpush2.msra.mxu0 0.0
      %922 = vmatprep.subr.mxu0 0.0
      %923 = vmatpush2.msra.mxu0 0.0
      %924 = vmatprep.subr.mxu0 0.0
      %925 = vmatpush2.msra.mxu0 0.0
      %926 = vmatprep.subr.mxu0 0.0
      %927 = vmatpush2.msra.mxu0 0.0
      %928 = vmatprep.subr.mxu0 0.0
      %929 = vmatpush2.msra.mxu0 0.0
      %930 = vmatprep.subr.mxu0 0.0
      %931 = vmatpush2.msra.mxu0 0.0
      %932 = vmatprep.subr.mxu0 0.0
      %933 = vmatpush2.msra.mxu0 0.0
      %934 = vmatprep.subr.mxu0 0.0
      %935 = vmatpush2.msra.mxu0 0.0
      %936 = vmatprep.subr.mxu0 0.0
      %937 = vmatpush2.msra.mxu0 0.0
      %938 = vmatprep.subr.mxu0 0.0
      %939 = vmatpush2.msra.mxu0 0.0
      %940 = vmatprep.subr.mxu0 0.0
      %941 = vmatpush2.msra.mxu0 0.0
      %942 = vmatprep.mubr.f32.mxu0 0.0
      %943 = vmatmul.mubr.f32.gmra.mxu0 %v867
      %v944 = vpop.f32.mrf.mxu0
      %v945 = vadd.f32 0.0, %v944
      %v946 = vpop.f32.mrf.mxu0
      %v947 = vadd.f32 0.0, %v946
      %948 = vdwg.mxu0
      %949 = vmatprep.subr.mxu0 0.0
      %950 = vmatpush1.msra.mxu0 %v689
      %951 = vmatprep.subr.mxu0 0.0
      %952 = vmatpush1.msra.mxu0 %v686
      %953 = vmatprep.subr.mxu0 0.0
      %954 = vmatpush1.msra.mxu0 %v683
      %955 = vmatprep.subr.mxu0 0.0
      %956 = vmatpush1.msra.mxu0 %v680
      %957 = vmatprep.subr.mxu0 0.0
      %958 = vmatpush1.msra.mxu0 %v677
      %959 = vmatprep.subr.mxu0 0.0
      %960 = vmatpush1.msra.mxu0 %v674
      %961 = vmatprep.subr.mxu0 0.0
      %962 = vmatpush1.msra.mxu0 %v671
      %963 = vmatprep.subr.mxu0 0.0
      %964 = vmatpush1.msra.mxu0 %v668
      %965 = vmatprep.subr.mxu0 0.0
      %966 = vmatpush1.msra.mxu0 %v665
      %967 = vmatprep.subr.mxu0 0.0
      %968 = vmatpush1.msra.mxu0 %v662
      %969 = vmatprep.subr.mxu0 0.0
      %970 = vmatpush1.msra.mxu0 %v659
      %971 = vmatprep.subr.mxu0 0.0
      %972 = vmatpush1.msra.mxu0 %v656
      %973 = vmatprep.subr.mxu0 0.0
      %974 = vmatpush1.msra.mxu0 %v653
      %975 = vmatprep.subr.mxu0 0.0
      %976 = vmatpush1.msra.mxu0 %v650
      %977 = vmatprep.subr.mxu0 0.0
      %978 = vmatpush1.msra.mxu0 %v647
      %979 = vmatprep.subr.mxu0 0.0
      %980 = vmatpush1.msra.mxu0 %v644
      %981 = vmatprep.subr.mxu0 0.0
      %982 = vmatpush2.msra.mxu0 0.0
      %983 = vmatprep.subr.mxu0 0.0
      %984 = vmatpush2.msra.mxu0 0.0
      %985 = vmatprep.subr.mxu0 0.0
      %986 = vmatpush2.msra.mxu0 0.0
      %987 = vmatprep.subr.mxu0 0.0
      %988 = vmatpush2.msra.mxu0 0.0
      %989 = vmatprep.subr.mxu0 0.0
      %990 = vmatpush2.msra.mxu0 0.0
      %991 = vmatprep.subr.mxu0 0.0
      %992 = vmatpush2.msra.mxu0 0.0
      %993 = vmatprep.subr.mxu0 0.0
      %994 = vmatpush2.msra.mxu0 0.0
      %995 = vmatprep.subr.mxu0 0.0
      %996 = vmatpush2.msra.mxu0 0.0
      %997 = vmatprep.subr.mxu0 0.0
      %998 = vmatpush2.msra.mxu0 0.0
      %999 = vmatprep.subr.mxu0 0.0
      %1000 = vmatpush2.msra.mxu0 0.0
      %1001 = vmatprep.subr.mxu0 0.0
      %1002 = vmatpush2.msra.mxu0 0.0
      %1003 = vmatprep.subr.mxu0 0.0
      %1004 = vmatpush2.msra.mxu0 0.0
      %1005 = vmatprep.subr.mxu0 0.0
      %1006 = vmatpush2.msra.mxu0 0.0
      %1007 = vmatprep.subr.mxu0 0.0
      %1008 = vmatpush2.msra.mxu0 0.0
      %1009 = vmatprep.subr.mxu0 0.0
      %1010 = vmatpush2.msra.mxu0 0.0
      %1011 = vmatprep.subr.mxu0 0.0
      %1012 = vmatpush2.msra.mxu0 0.0
      %1013 = vmatprep.mubr.f32.mxu0 0.0
      %1014 = vmatmul.mubr.f32.gmra.mxu0 %v867
      %v1015 = vpop.f32.mrf.mxu0
      %v1016 = vadd.f32 0.0, %v1015
      %v1017 = vpop.f32.mrf.mxu0
      %1018 = vdwg.mxu0
      %v1019 = vadd.f32 %v875, %v945
      %v1020 = vxor.u32 %v1019, 2147483648
      %v1021 = vmul.f32 %v1020, 1.442695
      %v1022 = vpow.pop %v1021
      %v1023 = vadd.f32 %v1022, 1.0
      %v1024 = vrcp.pop %v1023
      %v1025 = vmul.f32 1.0, %v1024
      %v1026 = vadd.f32 %v876, %v947
      %v1027 = vxor.u32 %v1026, 2147483648
      %v1028 = vmul.f32 %v1027, 1.442695
      %v1029 = vpow.pop %v1028
      %v1030 = vadd.f32 %v1029, 1.0
      %v1031 = vrcp.pop %v1030
      %v1032 = vmul.f32 1.0, %v1031
      %v1033 = vadd.f32 %v1016, %v858
      %v1034 = vmul.f32 %v1025, %v1033
      %v1035 = vadd.f32 %v877, %v1034
      %v1036 = vtanh.pop %v1035
      %v1037 = vsub.f32 1.0, %v1032
      %v1038 = vmul.f32 %v1037, %v1036
      %v1039 = vmul.f32 %v1032, %v867
      %v1040 = vadd.f32 %v1038, %v1039
      %s1041 = smul.u32 %s871, 8
      %s1042 = scalar_lea.vmem %s309, %s1041
      %1043 = vst [vmem:[%s1042] sm:$0xff] %v1040
      %s1044 = scalar_select %p691, 2, 5
      %s1045 = smul.u32 %s1044, 3
      %s1046 = smul.addr %s1045, 8
      %s1047 = scalar_lea.vmem [#allocation2], %s1046
      %v1048 = vld [vmem:[%s1047] sm:$0xff]
      %v1049 = vld [vmem:[%s1047 + $0x8] sm:$0xff]
      %v1050 = vld [vmem:[%s1047 + $0x10] sm:$0xff]
      %1051 = vmatprep.subr.mxu0 %v688
      %1052 = vmatpush1.msra.mxu0 %v687
      %1053 = vmatprep.subr.mxu0 %v685
      %1054 = vmatpush1.msra.mxu0 %v684
      %1055 = vmatprep.subr.mxu0 %v682
      %1056 = vmatpush1.msra.mxu0 %v681
      %1057 = vmatprep.subr.mxu0 %v679
      %1058 = vmatpush1.msra.mxu0 %v678
      %1059 = vmatprep.subr.mxu0 %v676
      %1060 = vmatpush1.msra.mxu0 %v675
      %1061 = vmatprep.subr.mxu0 %v673
      %1062 = vmatpush1.msra.mxu0 %v672
      %1063 = vmatprep.subr.mxu0 %v670
      %1064 = vmatpush1.msra.mxu0 %v669
      %1065 = vmatprep.subr.mxu0 %v667
      %1066 = vmatpush1.msra.mxu0 %v666
      %1067 = vmatprep.subr.mxu0 %v664
      %1068 = vmatpush1.msra.mxu0 %v663
      %1069 = vmatprep.subr.mxu0 %v661
      %1070 = vmatpush1.msra.mxu0 %v660
      %1071 = vmatprep.subr.mxu0 %v658
      %1072 = vmatpush1.msra.mxu0 %v657
      %1073 = vmatprep.subr.mxu0 %v655
      %1074 = vmatpush1.msra.mxu0 %v654
      %1075 = vmatprep.subr.mxu0 %v652
      %1076 = vmatpush1.msra.mxu0 %v651
      %1077 = vmatprep.subr.mxu0 %v649
      %1078 = vmatpush1.msra.mxu0 %v648
      %1079 = vmatprep.subr.mxu0 %v646
      %1080 = vmatpush1.msra.mxu0 %v645
      %1081 = vmatprep.subr.mxu0 %v643
      %1082 = vmatpush1.msra.mxu0 %v642
      %1083 = vmatprep.subr.mxu0 0.0
      %1084 = vmatpush2.msra.mxu0 0.0
      %1085 = vmatprep.subr.mxu0 0.0
      %1086 = vmatpush2.msra.mxu0 0.0
      %1087 = vmatprep.subr.mxu0 0.0
      %1088 = vmatpush2.msra.mxu0 0.0
      %1089 = vmatprep.subr.mxu0 0.0
      %1090 = vmatpush2.msra.mxu0 0.0
      %1091 = vmatprep.subr.mxu0 0.0
      %1092 = vmatpush2.msra.mxu0 0.0
      %1093 = vmatprep.subr.mxu0 0.0
      %1094 = vmatpush2.msra.mxu0 0.0
      %1095 = vmatprep.subr.mxu0 0.0
      %1096 = vmatpush2.msra.mxu0 0.0
      %1097 = vmatprep.subr.mxu0 0.0
      %1098 = vmatpush2.msra.mxu0 0.0
      %1099 = vmatprep.subr.mxu0 0.0
      %1100 = vmatpush2.msra.mxu0 0.0
      %1101 = vmatprep.subr.mxu0 0.0
      %1102 = vmatpush2.msra.mxu0 0.0
      %1103 = vmatprep.subr.mxu0 0.0
      %1104 = vmatpush2.msra.mxu0 0.0
      %1105 = vmatprep.subr.mxu0 0.0
      %1106 = vmatpush2.msra.mxu0 0.0
      %1107 = vmatprep.subr.mxu0 0.0
      %1108 = vmatpush2.msra.mxu0 0.0
      %1109 = vmatprep.subr.mxu0 0.0
      %1110 = vmatpush2.msra.mxu0 0.0
      %1111 = vmatprep.subr.mxu0 0.0
      %1112 = vmatpush2.msra.mxu0 0.0
      %1113 = vmatprep.subr.mxu0 0.0
      %1114 = vmatpush2.msra.mxu0 0.0
      %1115 = vmatprep.mubr.f32.mxu0 0.0
      %1116 = vmatmul.mubr.f32.gmra.mxu0 %v1040
      %v1117 = vpop.f32.mrf.mxu0
      %v1118 = vadd.f32 0.0, %v1117
      %v1119 = vpop.f32.mrf.mxu0
      %v1120 = vadd.f32 0.0, %v1119
      %1121 = vdwg.mxu0
      %1122 = vmatprep.subr.mxu0 0.0
      %1123 = vmatpush1.msra.mxu0 %v689
      %1124 = vmatprep.subr.mxu0 0.0
      %1125 = vmatpush1.msra.mxu0 %v686
      %1126 = vmatprep.subr.mxu0 0.0
      %1127 = vmatpush1.msra.mxu0 %v683
      %1128 = vmatprep.subr.mxu0 0.0
      %1129 = vmatpush1.msra.mxu0 %v680
      %1130 = vmatprep.subr.mxu0 0.0
      %1131 = vmatpush1.msra.mxu0 %v677
      %1132 = vmatprep.subr.mxu0 0.0
      %1133 = vmatpush1.msra.mxu0 %v674
      %1134 = vmatprep.subr.mxu0 0.0
      %1135 = vmatpush1.msra.mxu0 %v671
      %1136 = vmatprep.subr.mxu0 0.0
      %1137 = vmatpush1.msra.mxu0 %v668
      %1138 = vmatprep.subr.mxu0 0.0
      %1139 = vmatpush1.msra.mxu0 %v665
      %1140 = vmatprep.subr.mxu0 0.0
      %1141 = vmatpush1.msra.mxu0 %v662
      %1142 = vmatprep.subr.mxu0 0.0
      %1143 = vmatpush1.msra.mxu0 %v659
      %1144 = vmatprep.subr.mxu0 0.0
      %1145 = vmatpush1.msra.mxu0 %v656
      %1146 = vmatprep.subr.mxu0 0.0
      %1147 = vmatpush1.msra.mxu0 %v653
      %1148 = vmatprep.subr.mxu0 0.0
      %1149 = vmatpush1.msra.mxu0 %v650
      %1150 = vmatprep.subr.mxu0 0.0
      %1151 = vmatpush1.msra.mxu0 %v647
      %1152 = vmatprep.subr.mxu0 0.0
      %1153 = vmatpush1.msra.mxu0 %v644
      %1154 = vmatprep.subr.mxu0 0.0
      %1155 = vmatpush2.msra.mxu0 0.0
      %1156 = vmatprep.subr.mxu0 0.0
      %1157 = vmatpush2.msra.mxu0 0.0
      %1158 = vmatprep.subr.mxu0 0.0
      %1159 = vmatpush2.msra.mxu0 0.0
      %1160 = vmatprep.subr.mxu0 0.0
      %1161 = vmatpush2.msra.mxu0 0.0
      %1162 = vmatprep.subr.mxu0 0.0
      %1163 = vmatpush2.msra.mxu0 0.0
      %1164 = vmatprep.subr.mxu0 0.0
      %1165 = vmatpush2.msra.mxu0 0.0
      %1166 = vmatprep.subr.mxu0 0.0
      %1167 = vmatpush2.msra.mxu0 0.0
      %1168 = vmatprep.subr.mxu0 0.0
      %1169 = vmatpush2.msra.mxu0 0.0
      %1170 = vmatprep.subr.mxu0 0.0
      %1171 = vmatpush2.msra.mxu0 0.0
      %1172 = vmatprep.subr.mxu0 0.0
      %1173 = vmatpush2.msra.mxu0 0.0
      %1174 = vmatprep.subr.mxu0 0.0
      %1175 = vmatpush2.msra.mxu0 0.0
      %1176 = vmatprep.subr.mxu0 0.0
      %1177 = vmatpush2.msra.mxu0 0.0
      %1178 = vmatprep.subr.mxu0 0.0
      %1179 = vmatpush2.msra.mxu0 0.0
      %1180 = vmatprep.subr.mxu0 0.0
      %1181 = vmatpush2.msra.mxu0 0.0
      %1182 = vmatprep.subr.mxu0 0.0
      %1183 = vmatpush2.msra.mxu0 0.0
      %1184 = vmatprep.subr.mxu0 0.0
      %1185 = vmatpush2.msra.mxu0 0.0
      %1186 = vmatprep.mubr.f32.mxu0 0.0
      %1187 = vmatmul.mubr.f32.gmra.mxu0 %v1040
      %v1188 = vpop.f32.mrf.mxu0
      %v1189 = vadd.f32 0.0, %v1188
      %v1190 = vpop.f32.mrf.mxu0
      %1191 = vdwg.mxu0
      %v1192 = vadd.f32 %v1048, %v1118
      %v1193 = vxor.u32 %v1192, 2147483648
      %v1194 = vmul.f32 %v1193, 1.442695
      %v1195 = vpow.pop %v1194
      %v1196 = vadd.f32 %v1195, 1.0
      %v1197 = vrcp.pop %v1196
      %v1198 = vmul.f32 1.0, %v1197
      %v1199 = vadd.f32 %v1049, %v1120
      %v1200 = vxor.u32 %v1199, 2147483648
      %v1201 = vmul.f32 %v1200, 1.442695
      %v1202 = vpow.pop %v1201
      %v1203 = vadd.f32 %v1202, 1.0
      %v1204 = vrcp.pop %v1203
      %v1205 = vmul.f32 1.0, %v1204
      %v1206 = vadd.f32 %v1189, %v858
      %v1207 = vmul.f32 %v1198, %v1206
      %v1208 = vadd.f32 %v1050, %v1207
      %v1209 = vtanh.pop %v1208
      %v1210 = vsub.f32 1.0, %v1205
      %v1211 = vmul.f32 %v1210, %v1209
      %v1212 = vmul.f32 %v1205, %v1040
      %v1213 = vadd.f32 %v1211, %v1212
      %s1214 = smul.u32 %s1044, 8
      %s1215 = scalar_lea.vmem %s309, %s1214
      %1216 = vst [vmem:[%s1215] sm:$0xff] %v1213
      %s1217 = scalar_select %p691, 3, 4
      %s1218 = smul.u32 %s1217, 3
      %s1219 = smul.addr %s1218, 8
      %s1220 = scalar_lea.vmem [#allocation2], %s1219
      %v1221 = vld [vmem:[%s1220] sm:$0xff]
      %v1222 = vld [vmem:[%s1220 + $0x8] sm:$0xff]
      %v1223 = vld [vmem:[%s1220 + $0x10] sm:$0xff]
      %1224 = vmatprep.subr.mxu0 %v688
      %1225 = vmatpush1.msra.mxu0 %v687
      %1226 = vmatprep.subr.mxu0 %v685
      %1227 = vmatpush1.msra.mxu0 %v684
      %1228 = vmatprep.subr.mxu0 %v682
      %1229 = vmatpush1.msra.mxu0 %v681
      %1230 = vmatprep.subr.mxu0 %v679
      %1231 = vmatpush1.msra.mxu0 %v678
      %1232 = vmatprep.subr.mxu0 %v676
      %1233 = vmatpush1.msra.mxu0 %v675
      %1234 = vmatprep.subr.mxu0 %v673
      %1235 = vmatpush1.msra.mxu0 %v672
      %1236 = vmatprep.subr.mxu0 %v670
      %1237 = vmatpush1.msra.mxu0 %v669
      %1238 = vmatprep.subr.mxu0 %v667
      %1239 = vmatpush1.msra.mxu0 %v666
      %1240 = vmatprep.subr.mxu0 %v664
      %1241 = vmatpush1.msra.mxu0 %v663
      %1242 = vmatprep.subr.mxu0 %v661
      %1243 = vmatpush1.msra.mxu0 %v660
      %1244 = vmatprep.subr.mxu0 %v658
      %1245 = vmatpush1.msra.mxu0 %v657
      %1246 = vmatprep.subr.mxu0 %v655
      %1247 = vmatpush1.msra.mxu0 %v654
      %1248 = vmatprep.subr.mxu0 %v652
      %1249 = vmatpush1.msra.mxu0 %v651
      %1250 = vmatprep.subr.mxu0 %v649
      %1251 = vmatpush1.msra.mxu0 %v648
      %1252 = vmatprep.subr.mxu0 %v646
      %1253 = vmatpush1.msra.mxu0 %v645
      %1254 = vmatprep.subr.mxu0 %v643
      %1255 = vmatpush1.msra.mxu0 %v642
      %1256 = vmatprep.subr.mxu0 0.0
      %1257 = vmatpush2.msra.mxu0 0.0
      %1258 = vmatprep.subr.mxu0 0.0
      %1259 = vmatpush2.msra.mxu0 0.0
      %1260 = vmatprep.subr.mxu0 0.0
      %1261 = vmatpush2.msra.mxu0 0.0
      %1262 = vmatprep.subr.mxu0 0.0
      %1263 = vmatpush2.msra.mxu0 0.0
      %1264 = vmatprep.subr.mxu0 0.0
      %1265 = vmatpush2.msra.mxu0 0.0
      %1266 = vmatprep.subr.mxu0 0.0
      %1267 = vmatpush2.msra.mxu0 0.0
      %1268 = vmatprep.subr.mxu0 0.0
      %1269 = vmatpush2.msra.mxu0 0.0
      %1270 = vmatprep.subr.mxu0 0.0
      %1271 = vmatpush2.msra.mxu0 0.0
      %1272 = vmatprep.subr.mxu0 0.0
      %1273 = vmatpush2.msra.mxu0 0.0
      %1274 = vmatprep.subr.mxu0 0.0
      %1275 = vmatpush2.msra.mxu0 0.0
      %1276 = vmatprep.subr.mxu0 0.0
      %1277 = vmatpush2.msra.mxu0 0.0
      %1278 = vmatprep.subr.mxu0 0.0
      %1279 = vmatpush2.msra.mxu0 0.0
      %1280 = vmatprep.subr.mxu0 0.0
      %1281 = vmatpush2.msra.mxu0 0.0
      %1282 = vmatprep.subr.mxu0 0.0
      %1283 = vmatpush2.msra.mxu0 0.0
      %1284 = vmatprep.subr.mxu0 0.0
      %1285 = vmatpush2.msra.mxu0 0.0
      %1286 = vmatprep.subr.mxu0 0.0
      %1287 = vmatpush2.msra.mxu0 0.0
      %1288 = vmatprep.mubr.f32.mxu0 0.0
      %1289 = vmatmul.mubr.f32.gmra.mxu0 %v1213
      %v1290 = vpop.f32.mrf.mxu0
      %v1291 = vadd.f32 0.0, %v1290
      %v1292 = vpop.f32.mrf.mxu0
      %v1293 = vadd.f32 0.0, %v1292
      %1294 = vdwg.mxu0
      %1295 = vmatprep.subr.mxu0 0.0
      %1296 = vmatpush1.msra.mxu0 %v689
      %1297 = vmatprep.subr.mxu0 0.0
      %1298 = vmatpush1.msra.mxu0 %v686
      %1299 = vmatprep.subr.mxu0 0.0
      %1300 = vmatpush1.msra.mxu0 %v683
      %1301 = vmatprep.subr.mxu0 0.0
      %1302 = vmatpush1.msra.mxu0 %v680
      %1303 = vmatprep.subr.mxu0 0.0
      %1304 = vmatpush1.msra.mxu0 %v677
      %1305 = vmatprep.subr.mxu0 0.0
      %1306 = vmatpush1.msra.mxu0 %v674
      %1307 = vmatprep.subr.mxu0 0.0
      %1308 = vmatpush1.msra.mxu0 %v671
      %1309 = vmatprep.subr.mxu0 0.0
      %1310 = vmatpush1.msra.mxu0 %v668
      %1311 = vmatprep.subr.mxu0 0.0
      %1312 = vmatpush1.msra.mxu0 %v665
      %1313 = vmatprep.subr.mxu0 0.0
      %1314 = vmatpush1.msra.mxu0 %v662
      %1315 = vmatprep.subr.mxu0 0.0
      %1316 = vmatpush1.msra.mxu0 %v659
      %1317 = vmatprep.subr.mxu0 0.0
      %1318 = vmatpush1.msra.mxu0 %v656
      %1319 = vmatprep.subr.mxu0 0.0
      %1320 = vmatpush1.msra.mxu0 %v653
      %1321 = vmatprep.subr.mxu0 0.0
      %1322 = vmatpush1.msra.mxu0 %v650
      %1323 = vmatprep.subr.mxu0 0.0
      %1324 = vmatpush1.msra.mxu0 %v647
      %1325 = vmatprep.subr.mxu0 0.0
      %1326 = vmatpush1.msra.mxu0 %v644
      %1327 = vmatprep.subr.mxu0 0.0
      %1328 = vmatpush2.msra.mxu0 0.0
      %1329 = vmatprep.subr.mxu0 0.0
      %1330 = vmatpush2.msra.mxu0 0.0
      %1331 = vmatprep.subr.mxu0 0.0
      %1332 = vmatpush2.msra.mxu0 0.0
      %1333 = vmatprep.subr.mxu0 0.0
      %1334 = vmatpush2.msra.mxu0 0.0
      %1335 = vmatprep.subr.mxu0 0.0
      %1336 = vmatpush2.msra.mxu0 0.0
      %1337 = vmatprep.subr.mxu0 0.0
      %1338 = vmatpush2.msra.mxu0 0.0
      %1339 = vmatprep.subr.mxu0 0.0
      %1340 = vmatpush2.msra.mxu0 0.0
      %1341 = vmatprep.subr.mxu0 0.0
      %1342 = vmatpush2.msra.mxu0 0.0
      %1343 = vmatprep.subr.mxu0 0.0
      %1344 = vmatpush2.msra.mxu0 0.0
      %1345 = vmatprep.subr.mxu0 0.0
      %1346 = vmatpush2.msra.mxu0 0.0
      %1347 = vmatprep.subr.mxu0 0.0
      %1348 = vmatpush2.msra.mxu0 0.0
      %1349 = vmatprep.subr.mxu0 0.0
      %1350 = vmatpush2.msra.mxu0 0.0
      %1351 = vmatprep.subr.mxu0 0.0
      %1352 = vmatpush2.msra.mxu0 0.0
      %1353 = vmatprep.subr.mxu0 0.0
      %1354 = vmatpush2.msra.mxu0 0.0
      %1355 = vmatprep.subr.mxu0 0.0
      %1356 = vmatpush2.msra.mxu0 0.0
      %1357 = vmatprep.subr.mxu0 0.0
      %1358 = vmatpush2.msra.mxu0 0.0
      %1359 = vmatprep.mubr.f32.mxu0 0.0
      %1360 = vmatmul.mubr.f32.gmra.mxu0 %v1213
      %v1361 = vpop.f32.mrf.mxu0
      %v1362 = vadd.f32 0.0, %v1361
      %v1363 = vpop.f32.mrf.mxu0
      %1364 = vdwg.mxu0
      %v1365 = vadd.f32 %v1221, %v1291
      %v1366 = vxor.u32 %v1365, 2147483648
      %v1367 = vmul.f32 %v1366, 1.442695
      %v1368 = vpow.pop %v1367
      %v1369 = vadd.f32 %v1368, 1.0
      %v1370 = vrcp.pop %v1369
      %v1371 = vmul.f32 1.0, %v1370
      %v1372 = vadd.f32 %v1222, %v1293
      %v1373 = vxor.u32 %v1372, 2147483648
      %v1374 = vmul.f32 %v1373, 1.442695
      %v1375 = vpow.pop %v1374
      %v1376 = vadd.f32 %v1375, 1.0
      %v1377 = vrcp.pop %v1376
      %v1378 = vmul.f32 1.0, %v1377
      %v1379 = vadd.f32 %v1362, %v858
      %v1380 = vmul.f32 %v1371, %v1379
      %v1381 = vadd.f32 %v1223, %v1380
      %v1382 = vtanh.pop %v1381
      %v1383 = vsub.f32 1.0, %v1378
      %v1384 = vmul.f32 %v1383, %v1382
      %v1385 = vmul.f32 %v1378, %v1213
      %v1386 = vadd.f32 %v1384, %v1385
      %s1387 = smul.u32 %s1217, 8
      %s1388 = scalar_lea.vmem %s309, %s1387
      %1389 = vst [vmem:[%s1388] sm:$0xff] %v1386
      %s1390 = scalar_select %p691, 4, 3
      %s1391 = smul.u32 %s1390, 3
      %s1392 = smul.addr %s1391, 8
      %s1393 = scalar_lea.vmem [#allocation2], %s1392
      %v1394 = vld [vmem:[%s1393] sm:$0xff]
      %v1395 = vld [vmem:[%s1393 + $0x8] sm:$0xff]
      %v1396 = vld [vmem:[%s1393 + $0x10] sm:$0xff]
      %1397 = vmatprep.subr.mxu0 %v688
      %1398 = vmatpush1.msra.mxu0 %v687
      %1399 = vmatprep.subr.mxu0 %v685
      %1400 = vmatpush1.msra.mxu0 %v684
      %1401 = vmatprep.subr.mxu0 %v682
      %1402 = vmatpush1.msra.mxu0 %v681
      %1403 = vmatprep.subr.mxu0 %v679
      %1404 = vmatpush1.msra.mxu0 %v678
      %1405 = vmatprep.subr.mxu0 %v676
      %1406 = vmatpush1.msra.mxu0 %v675
      %1407 = vmatprep.subr.mxu0 %v673
      %1408 = vmatpush1.msra.mxu0 %v672
      %1409 = vmatprep.subr.mxu0 %v670
      %1410 = vmatpush1.msra.mxu0 %v669
      %1411 = vmatprep.subr.mxu0 %v667
      %1412 = vmatpush1.msra.mxu0 %v666
      %1413 = vmatprep.subr.mxu0 %v664
      %1414 = vmatpush1.msra.mxu0 %v663
      %1415 = vmatprep.subr.mxu0 %v661
      %1416 = vmatpush1.msra.mxu0 %v660
      %1417 = vmatprep.subr.mxu0 %v658
      %1418 = vmatpush1.msra.mxu0 %v657
      %1419 = vmatprep.subr.mxu0 %v655
      %1420 = vmatpush1.msra.mxu0 %v654
      %1421 = vmatprep.subr.mxu0 %v652
      %1422 = vmatpush1.msra.mxu0 %v651
      %1423 = vmatprep.subr.mxu0 %v649
      %1424 = vmatpush1.msra.mxu0 %v648
      %1425 = vmatprep.subr.mxu0 %v646
      %1426 = vmatpush1.msra.mxu0 %v645
      %1427 = vmatprep.subr.mxu0 %v643
      %1428 = vmatpush1.msra.mxu0 %v642
      %1429 = vmatprep.subr.mxu0 0.0
      %1430 = vmatpush2.msra.mxu0 0.0
      %1431 = vmatprep.subr.mxu0 0.0
      %1432 = vmatpush2.msra.mxu0 0.0
      %1433 = vmatprep.subr.mxu0 0.0
      %1434 = vmatpush2.msra.mxu0 0.0
      %1435 = vmatprep.subr.mxu0 0.0
      %1436 = vmatpush2.msra.mxu0 0.0
      %1437 = vmatprep.subr.mxu0 0.0
      %1438 = vmatpush2.msra.mxu0 0.0
      %1439 = vmatprep.subr.mxu0 0.0
      %1440 = vmatpush2.msra.mxu0 0.0
      %1441 = vmatprep.subr.mxu0 0.0
      %1442 = vmatpush2.msra.mxu0 0.0
      %1443 = vmatprep.subr.mxu0 0.0
      %1444 = vmatpush2.msra.mxu0 0.0
      %1445 = vmatprep.subr.mxu0 0.0
      %1446 = vmatpush2.msra.mxu0 0.0
      %1447 = vmatprep.subr.mxu0 0.0
      %1448 = vmatpush2.msra.mxu0 0.0
      %1449 = vmatprep.subr.mxu0 0.0
      %1450 = vmatpush2.msra.mxu0 0.0
      %1451 = vmatprep.subr.mxu0 0.0
      %1452 = vmatpush2.msra.mxu0 0.0
      %1453 = vmatprep.subr.mxu0 0.0
      %1454 = vmatpush2.msra.mxu0 0.0
      %1455 = vmatprep.subr.mxu0 0.0
      %1456 = vmatpush2.msra.mxu0 0.0
      %1457 = vmatprep.subr.mxu0 0.0
      %1458 = vmatpush2.msra.mxu0 0.0
      %1459 = vmatprep.subr.mxu0 0.0
      %1460 = vmatpush2.msra.mxu0 0.0
      %1461 = vmatprep.mubr.f32.mxu0 0.0
      %1462 = vmatmul.mubr.f32.gmra.mxu0 %v1386
      %v1463 = vpop.f32.mrf.mxu0
      %v1464 = vadd.f32 0.0, %v1463
      %v1465 = vpop.f32.mrf.mxu0
      %v1466 = vadd.f32 0.0, %v1465
      %1467 = vdwg.mxu0
      %1468 = vmatprep.subr.mxu0 0.0
      %1469 = vmatpush1.msra.mxu0 %v689
      %1470 = vmatprep.subr.mxu0 0.0
      %1471 = vmatpush1.msra.mxu0 %v686
      %1472 = vmatprep.subr.mxu0 0.0
      %1473 = vmatpush1.msra.mxu0 %v683
      %1474 = vmatprep.subr.mxu0 0.0
      %1475 = vmatpush1.msra.mxu0 %v680
      %1476 = vmatprep.subr.mxu0 0.0
      %1477 = vmatpush1.msra.mxu0 %v677
      %1478 = vmatprep.subr.mxu0 0.0
      %1479 = vmatpush1.msra.mxu0 %v674
      %1480 = vmatprep.subr.mxu0 0.0
      %1481 = vmatpush1.msra.mxu0 %v671
      %1482 = vmatprep.subr.mxu0 0.0
      %1483 = vmatpush1.msra.mxu0 %v668
      %1484 = vmatprep.subr.mxu0 0.0
      %1485 = vmatpush1.msra.mxu0 %v665
      %1486 = vmatprep.subr.mxu0 0.0
      %1487 = vmatpush1.msra.mxu0 %v662
      %1488 = vmatprep.subr.mxu0 0.0
      %1489 = vmatpush1.msra.mxu0 %v659
      %1490 = vmatprep.subr.mxu0 0.0
      %1491 = vmatpush1.msra.mxu0 %v656
      %1492 = vmatprep.subr.mxu0 0.0
      %1493 = vmatpush1.msra.mxu0 %v653
      %1494 = vmatprep.subr.mxu0 0.0
      %1495 = vmatpush1.msra.mxu0 %v650
      %1496 = vmatprep.subr.mxu0 0.0
      %1497 = vmatpush1.msra.mxu0 %v647
      %1498 = vmatprep.subr.mxu0 0.0
      %1499 = vmatpush1.msra.mxu0 %v644
      %1500 = vmatprep.subr.mxu0 0.0
      %1501 = vmatpush2.msra.mxu0 0.0
      %1502 = vmatprep.subr.mxu0 0.0
      %1503 = vmatpush2.msra.mxu0 0.0
      %1504 = vmatprep.subr.mxu0 0.0
      %1505 = vmatpush2.msra.mxu0 0.0
      %1506 = vmatprep.subr.mxu0 0.0
      %1507 = vmatpush2.msra.mxu0 0.0
      %1508 = vmatprep.subr.mxu0 0.0
      %1509 = vmatpush2.msra.mxu0 0.0
      %1510 = vmatprep.subr.mxu0 0.0
      %1511 = vmatpush2.msra.mxu0 0.0
      %1512 = vmatprep.subr.mxu0 0.0
      %1513 = vmatpush2.msra.mxu0 0.0
      %1514 = vmatprep.subr.mxu0 0.0
      %1515 = vmatpush2.msra.mxu0 0.0
      %1516 = vmatprep.subr.mxu0 0.0
      %1517 = vmatpush2.msra.mxu0 0.0
      %1518 = vmatprep.subr.mxu0 0.0
      %1519 = vmatpush2.msra.mxu0 0.0
      %1520 = vmatprep.subr.mxu0 0.0
      %1521 = vmatpush2.msra.mxu0 0.0
      %1522 = vmatprep.subr.mxu0 0.0
      %1523 = vmatpush2.msra.mxu0 0.0
      %1524 = vmatprep.subr.mxu0 0.0
      %1525 = vmatpush2.msra.mxu0 0.0
      %1526 = vmatprep.subr.mxu0 0.0
      %1527 = vmatpush2.msra.mxu0 0.0
      %1528 = vmatprep.subr.mxu0 0.0
      %1529 = vmatpush2.msra.mxu0 0.0
      %1530 = vmatprep.subr.mxu0 0.0
      %1531 = vmatpush2.msra.mxu0 0.0
      %1532 = vmatprep.mubr.f32.mxu0 0.0
      %1533 = vmatmul.mubr.f32.gmra.mxu0 %v1386
      %v1534 = vpop.f32.mrf.mxu0
      %v1535 = vadd.f32 0.0, %v1534
      %v1536 = vpop.f32.mrf.mxu0
      %1537 = vdwg.mxu0
      %v1538 = vadd.f32 %v1394, %v1464
      %v1539 = vxor.u32 %v1538, 2147483648
      %v1540 = vmul.f32 %v1539, 1.442695
      %v1541 = vpow.pop %v1540
      %v1542 = vadd.f32 %v1541, 1.0
      %v1543 = vrcp.pop %v1542
      %v1544 = vmul.f32 1.0, %v1543
      %v1545 = vadd.f32 %v1395, %v1466
      %v1546 = vxor.u32 %v1545, 2147483648
      %v1547 = vmul.f32 %v1546, 1.442695
      %v1548 = vpow.pop %v1547
      %v1549 = vadd.f32 %v1548, 1.0
      %v1550 = vrcp.pop %v1549
      %v1551 = vmul.f32 1.0, %v1550
      %v1552 = vadd.f32 %v1535, %v858
      %v1553 = vmul.f32 %v1544, %v1552
      %v1554 = vadd.f32 %v1396, %v1553
      %v1555 = vtanh.pop %v1554
      %v1556 = vsub.f32 1.0, %v1551
      %v1557 = vmul.f32 %v1556, %v1555
      %v1558 = vmul.f32 %v1551, %v1386
      %v1559 = vadd.f32 %v1557, %v1558
      %s1560 = smul.u32 %s1390, 8
      %s1561 = scalar_lea.vmem %s309, %s1560
      %1562 = vst [vmem:[%s1561] sm:$0xff] %v1559
      %s1563 = scalar_select %p691, 5, 2
      %s1564 = smul.u32 %s1563, 3
      %s1565 = smul.addr %s1564, 8
      %s1566 = scalar_lea.vmem [#allocation2], %s1565
      %v1567 = vld [vmem:[%s1566] sm:$0xff]
      %v1568 = vld [vmem:[%s1566 + $0x8] sm:$0xff]
      %v1569 = vld [vmem:[%s1566 + $0x10] sm:$0xff]
      %1570 = vmatprep.subr.mxu0 %v688
      %1571 = vmatpush1.msra.mxu0 %v687
      %1572 = vmatprep.subr.mxu0 %v685
      %1573 = vmatpush1.msra.mxu0 %v684
      %1574 = vmatprep.subr.mxu0 %v682
      %1575 = vmatpush1.msra.mxu0 %v681
      %1576 = vmatprep.subr.mxu0 %v679
      %1577 = vmatpush1.msra.mxu0 %v678
      %1578 = vmatprep.subr.mxu0 %v676
      %1579 = vmatpush1.msra.mxu0 %v675
      %1580 = vmatprep.subr.mxu0 %v673
      %1581 = vmatpush1.msra.mxu0 %v672
      %1582 = vmatprep.subr.mxu0 %v670
      %1583 = vmatpush1.msra.mxu0 %v669
      %1584 = vmatprep.subr.mxu0 %v667
      %1585 = vmatpush1.msra.mxu0 %v666
      %1586 = vmatprep.subr.mxu0 %v664
      %1587 = vmatpush1.msra.mxu0 %v663
      %1588 = vmatprep.subr.mxu0 %v661
      %1589 = vmatpush1.msra.mxu0 %v660
      %1590 = vmatprep.subr.mxu0 %v658
      %1591 = vmatpush1.msra.mxu0 %v657
      %1592 = vmatprep.subr.mxu0 %v655
      %1593 = vmatpush1.msra.mxu0 %v654
      %1594 = vmatprep.subr.mxu0 %v652
      %1595 = vmatpush1.msra.mxu0 %v651
      %1596 = vmatprep.subr.mxu0 %v649
      %1597 = vmatpush1.msra.mxu0 %v648
      %1598 = vmatprep.subr.mxu0 %v646
      %1599 = vmatpush1.msra.mxu0 %v645
      %1600 = vmatprep.subr.mxu0 %v643
      %1601 = vmatpush1.msra.mxu0 %v642
      %1602 = vmatprep.subr.mxu0 0.0
      %1603 = vmatpush2.msra.mxu0 0.0
      %1604 = vmatprep.subr.mxu0 0.0
      %1605 = vmatpush2.msra.mxu0 0.0
      %1606 = vmatprep.subr.mxu0 0.0
      %1607 = vmatpush2.msra.mxu0 0.0
      %1608 = vmatprep.subr.mxu0 0.0
      %1609 = vmatpush2.msra.mxu0 0.0
      %1610 = vmatprep.subr.mxu0 0.0
      %1611 = vmatpush2.msra.mxu0 0.0
      %1612 = vmatprep.subr.mxu0 0.0
      %1613 = vmatpush2.msra.mxu0 0.0
      %1614 = vmatprep.subr.mxu0 0.0
      %1615 = vmatpush2.msra.mxu0 0.0
      %1616 = vmatprep.subr.mxu0 0.0
      %1617 = vmatpush2.msra.mxu0 0.0
      %1618 = vmatprep.subr.mxu0 0.0
      %1619 = vmatpush2.msra.mxu0 0.0
      %1620 = vmatprep.subr.mxu0 0.0
      %1621 = vmatpush2.msra.mxu0 0.0
      %1622 = vmatprep.subr.mxu0 0.0
      %1623 = vmatpush2.msra.mxu0 0.0
      %1624 = vmatprep.subr.mxu0 0.0
      %1625 = vmatpush2.msra.mxu0 0.0
      %1626 = vmatprep.subr.mxu0 0.0
      %1627 = vmatpush2.msra.mxu0 0.0
      %1628 = vmatprep.subr.mxu0 0.0
      %1629 = vmatpush2.msra.mxu0 0.0
      %1630 = vmatprep.subr.mxu0 0.0
      %1631 = vmatpush2.msra.mxu0 0.0
      %1632 = vmatprep.subr.mxu0 0.0
      %1633 = vmatpush2.msra.mxu0 0.0
      %1634 = vmatprep.mubr.f32.mxu0 0.0
      %1635 = vmatmul.mubr.f32.gmra.mxu0 %v1559
      %v1636 = vpop.f32.mrf.mxu0
      %v1637 = vadd.f32 0.0, %v1636
      %v1638 = vpop.f32.mrf.mxu0
      %v1639 = vadd.f32 0.0, %v1638
      %1640 = vdwg.mxu0
      %1641 = vmatprep.subr.mxu0 0.0
      %1642 = vmatpush1.msra.mxu0 %v689
      %1643 = vmatprep.subr.mxu0 0.0
      %1644 = vmatpush1.msra.mxu0 %v686
      %1645 = vmatprep.subr.mxu0 0.0
      %1646 = vmatpush1.msra.mxu0 %v683
      %1647 = vmatprep.subr.mxu0 0.0
      %1648 = vmatpush1.msra.mxu0 %v680
      %1649 = vmatprep.subr.mxu0 0.0
      %1650 = vmatpush1.msra.mxu0 %v677
      %1651 = vmatprep.subr.mxu0 0.0
      %1652 = vmatpush1.msra.mxu0 %v674
      %1653 = vmatprep.subr.mxu0 0.0
      %1654 = vmatpush1.msra.mxu0 %v671
      %1655 = vmatprep.subr.mxu0 0.0
      %1656 = vmatpush1.msra.mxu0 %v668
      %1657 = vmatprep.subr.mxu0 0.0
      %1658 = vmatpush1.msra.mxu0 %v665
      %1659 = vmatprep.subr.mxu0 0.0
      %1660 = vmatpush1.msra.mxu0 %v662
      %1661 = vmatprep.subr.mxu0 0.0
      %1662 = vmatpush1.msra.mxu0 %v659
      %1663 = vmatprep.subr.mxu0 0.0
      %1664 = vmatpush1.msra.mxu0 %v656
      %1665 = vmatprep.subr.mxu0 0.0
      %1666 = vmatpush1.msra.mxu0 %v653
      %1667 = vmatprep.subr.mxu0 0.0
      %1668 = vmatpush1.msra.mxu0 %v650
      %1669 = vmatprep.subr.mxu0 0.0
      %1670 = vmatpush1.msra.mxu0 %v647
      %1671 = vmatprep.subr.mxu0 0.0
      %1672 = vmatpush1.msra.mxu0 %v644
      %1673 = vmatprep.subr.mxu0 0.0
      %1674 = vmatpush2.msra.mxu0 0.0
      %1675 = vmatprep.subr.mxu0 0.0
      %1676 = vmatpush2.msra.mxu0 0.0
      %1677 = vmatprep.subr.mxu0 0.0
      %1678 = vmatpush2.msra.mxu0 0.0
      %1679 = vmatprep.subr.mxu0 0.0
      %1680 = vmatpush2.msra.mxu0 0.0
      %1681 = vmatprep.subr.mxu0 0.0
      %1682 = vmatpush2.msra.mxu0 0.0
      %1683 = vmatprep.subr.mxu0 0.0
      %1684 = vmatpush2.msra.mxu0 0.0
      %1685 = vmatprep.subr.mxu0 0.0
      %1686 = vmatpush2.msra.mxu0 0.0
      %1687 = vmatprep.subr.mxu0 0.0
      %1688 = vmatpush2.msra.mxu0 0.0
      %1689 = vmatprep.subr.mxu0 0.0
      %1690 = vmatpush2.msra.mxu0 0.0
      %1691 = vmatprep.subr.mxu0 0.0
      %1692 = vmatpush2.msra.mxu0 0.0
      %1693 = vmatprep.subr.mxu0 0.0
      %1694 = vmatpush2.msra.mxu0 0.0
      %1695 = vmatprep.subr.mxu0 0.0
      %1696 = vmatpush2.msra.mxu0 0.0
      %1697 = vmatprep.subr.mxu0 0.0
      %1698 = vmatpush2.msra.mxu0 0.0
      %1699 = vmatprep.subr.mxu0 0.0
      %1700 = vmatpush2.msra.mxu0 0.0
      %1701 = vmatprep.subr.mxu0 0.0
      %1702 = vmatpush2.msra.mxu0 0.0
      %1703 = vmatprep.subr.mxu0 0.0
      %1704 = vmatpush2.msra.mxu0 0.0
      %1705 = vmatprep.mubr.f32.mxu0 0.0
      %1706 = vmatmul.mubr.f32.gmra.mxu0 %v1559
      %v1707 = vpop.f32.mrf.mxu0
      %v1708 = vadd.f32 0.0, %v1707
      %v1709 = vpop.f32.mrf.mxu0
      %1710 = vdwg.mxu0
      %v1711 = vadd.f32 %v1567, %v1637
      %v1712 = vxor.u32 %v1711, 2147483648
      %v1713 = vmul.f32 %v1712, 1.442695
      %v1714 = vpow.pop %v1713
      %v1715 = vadd.f32 %v1714, 1.0
      %v1716 = vrcp.pop %v1715
      %v1717 = vmul.f32 1.0, %v1716
      %v1718 = vadd.f32 %v1568, %v1639
      %v1719 = vxor.u32 %v1718, 2147483648
      %v1720 = vmul.f32 %v1719, 1.442695
      %v1721 = vpow.pop %v1720
      %v1722 = vadd.f32 %v1721, 1.0
      %v1723 = vrcp.pop %v1722
      %v1724 = vmul.f32 1.0, %v1723
      %v1725 = vadd.f32 %v1708, %v858
      %v1726 = vmul.f32 %v1717, %v1725
      %v1727 = vadd.f32 %v1569, %v1726
      %v1728 = vtanh.pop %v1727
      %v1729 = vsub.f32 1.0, %v1724
      %v1730 = vmul.f32 %v1729, %v1728
      %v1731 = vmul.f32 %v1724, %v1559
      %v1732 = vadd.f32 %v1730, %v1731
      %s1733 = smul.u32 %s1563, 8
      %s1734 = scalar_lea.vmem %s309, %s1733
      %1735 = vst [vmem:[%s1734] sm:$0xff] %v1732
      %s1736 = scalar_select %p691, 6, 1
      %s1737 = smul.u32 %s1736, 3
      %s1738 = smul.addr %s1737, 8
      %s1739 = scalar_lea.vmem [#allocation2], %s1738
      %v1740 = vld [vmem:[%s1739] sm:$0xff]
      %v1741 = vld [vmem:[%s1739 + $0x8] sm:$0xff]
      %v1742 = vld [vmem:[%s1739 + $0x10] sm:$0xff]
      %1743 = vmatprep.subr.mxu0 %v688
      %1744 = vmatpush1.msra.mxu0 %v687
      %1745 = vmatprep.subr.mxu0 %v685
      %1746 = vmatpush1.msra.mxu0 %v684
      %1747 = vmatprep.subr.mxu0 %v682
      %1748 = vmatpush1.msra.mxu0 %v681
      %1749 = vmatprep.subr.mxu0 %v679
      %1750 = vmatpush1.msra.mxu0 %v678
      %1751 = vmatprep.subr.mxu0 %v676
      %1752 = vmatpush1.msra.mxu0 %v675
      %1753 = vmatprep.subr.mxu0 %v673
      %1754 = vmatpush1.msra.mxu0 %v672
      %1755 = vmatprep.subr.mxu0 %v670
      %1756 = vmatpush1.msra.mxu0 %v669
      %1757 = vmatprep.subr.mxu0 %v667
      %1758 = vmatpush1.msra.mxu0 %v666
      %1759 = vmatprep.subr.mxu0 %v664
      %1760 = vmatpush1.msra.mxu0 %v663
      %1761 = vmatprep.subr.mxu0 %v661
      %1762 = vmatpush1.msra.mxu0 %v660
      %1763 = vmatprep.subr.mxu0 %v658
      %1764 = vmatpush1.msra.mxu0 %v657
      %1765 = vmatprep.subr.mxu0 %v655
      %1766 = vmatpush1.msra.mxu0 %v654
      %1767 = vmatprep.subr.mxu0 %v652
      %1768 = vmatpush1.msra.mxu0 %v651
      %1769 = vmatprep.subr.mxu0 %v649
      %1770 = vmatpush1.msra.mxu0 %v648
      %1771 = vmatprep.subr.mxu0 %v646
      %1772 = vmatpush1.msra.mxu0 %v645
      %1773 = vmatprep.subr.mxu0 %v643
      %1774 = vmatpush1.msra.mxu0 %v642
      %1775 = vmatprep.subr.mxu0 0.0
      %1776 = vmatpush2.msra.mxu0 0.0
      %1777 = vmatprep.subr.mxu0 0.0
      %1778 = vmatpush2.msra.mxu0 0.0
      %1779 = vmatprep.subr.mxu0 0.0
      %1780 = vmatpush2.msra.mxu0 0.0
      %1781 = vmatprep.subr.mxu0 0.0
      %1782 = vmatpush2.msra.mxu0 0.0
      %1783 = vmatprep.subr.mxu0 0.0
      %1784 = vmatpush2.msra.mxu0 0.0
      %1785 = vmatprep.subr.mxu0 0.0
      %1786 = vmatpush2.msra.mxu0 0.0
      %1787 = vmatprep.subr.mxu0 0.0
      %1788 = vmatpush2.msra.mxu0 0.0
      %1789 = vmatprep.subr.mxu0 0.0
      %1790 = vmatpush2.msra.mxu0 0.0
      %1791 = vmatprep.subr.mxu0 0.0
      %1792 = vmatpush2.msra.mxu0 0.0
      %1793 = vmatprep.subr.mxu0 0.0
      %1794 = vmatpush2.msra.mxu0 0.0
      %1795 = vmatprep.subr.mxu0 0.0
      %1796 = vmatpush2.msra.mxu0 0.0
      %1797 = vmatprep.subr.mxu0 0.0
      %1798 = vmatpush2.msra.mxu0 0.0
      %1799 = vmatprep.subr.mxu0 0.0
      %1800 = vmatpush2.msra.mxu0 0.0
      %1801 = vmatprep.subr.mxu0 0.0
      %1802 = vmatpush2.msra.mxu0 0.0
      %1803 = vmatprep.subr.mxu0 0.0
      %1804 = vmatpush2.msra.mxu0 0.0
      %1805 = vmatprep.subr.mxu0 0.0
      %1806 = vmatpush2.msra.mxu0 0.0
      %1807 = vmatprep.mubr.f32.mxu0 0.0
      %1808 = vmatmul.mubr.f32.gmra.mxu0 %v1732
      %v1809 = vpop.f32.mrf.mxu0
      %v1810 = vadd.f32 0.0, %v1809
      %v1811 = vpop.f32.mrf.mxu0
      %v1812 = vadd.f32 0.0, %v1811
      %1813 = vdwg.mxu0
      %1814 = vmatprep.subr.mxu0 0.0
      %1815 = vmatpush1.msra.mxu0 %v689
      %1816 = vmatprep.subr.mxu0 0.0
      %1817 = vmatpush1.msra.mxu0 %v686
      %1818 = vmatprep.subr.mxu0 0.0
      %1819 = vmatpush1.msra.mxu0 %v683
      %1820 = vmatprep.subr.mxu0 0.0
      %1821 = vmatpush1.msra.mxu0 %v680
      %1822 = vmatprep.subr.mxu0 0.0
      %1823 = vmatpush1.msra.mxu0 %v677
      %1824 = vmatprep.subr.mxu0 0.0
      %1825 = vmatpush1.msra.mxu0 %v674
      %1826 = vmatprep.subr.mxu0 0.0
      %1827 = vmatpush1.msra.mxu0 %v671
      %1828 = vmatprep.subr.mxu0 0.0
      %1829 = vmatpush1.msra.mxu0 %v668
      %1830 = vmatprep.subr.mxu0 0.0
      %1831 = vmatpush1.msra.mxu0 %v665
      %1832 = vmatprep.subr.mxu0 0.0
      %1833 = vmatpush1.msra.mxu0 %v662
      %1834 = vmatprep.subr.mxu0 0.0
      %1835 = vmatpush1.msra.mxu0 %v659
      %1836 = vmatprep.subr.mxu0 0.0
      %1837 = vmatpush1.msra.mxu0 %v656
      %1838 = vmatprep.subr.mxu0 0.0
      %1839 = vmatpush1.msra.mxu0 %v653
      %1840 = vmatprep.subr.mxu0 0.0
      %1841 = vmatpush1.msra.mxu0 %v650
      %1842 = vmatprep.subr.mxu0 0.0
      %1843 = vmatpush1.msra.mxu0 %v647
      %1844 = vmatprep.subr.mxu0 0.0
      %1845 = vmatpush1.msra.mxu0 %v644
      %1846 = vmatprep.subr.mxu0 0.0
      %1847 = vmatpush2.msra.mxu0 0.0
      %1848 = vmatprep.subr.mxu0 0.0
      %1849 = vmatpush2.msra.mxu0 0.0
      %1850 = vmatprep.subr.mxu0 0.0
      %1851 = vmatpush2.msra.mxu0 0.0
      %1852 = vmatprep.subr.mxu0 0.0
      %1853 = vmatpush2.msra.mxu0 0.0
      %1854 = vmatprep.subr.mxu0 0.0
      %1855 = vmatpush2.msra.mxu0 0.0
      %1856 = vmatprep.subr.mxu0 0.0
      %1857 = vmatpush2.msra.mxu0 0.0
      %1858 = vmatprep.subr.mxu0 0.0
      %1859 = vmatpush2.msra.mxu0 0.0
      %1860 = vmatprep.subr.mxu0 0.0
      %1861 = vmatpush2.msra.mxu0 0.0
      %1862 = vmatprep.subr.mxu0 0.0
      %1863 = vmatpush2.msra.mxu0 0.0
      %1864 = vmatprep.subr.mxu0 0.0
      %1865 = vmatpush2.msra.mxu0 0.0
      %1866 = vmatprep.subr.mxu0 0.0
      %1867 = vmatpush2.msra.mxu0 0.0
      %1868 = vmatprep.subr.mxu0 0.0
      %1869 = vmatpush2.msra.mxu0 0.0
      %1870 = vmatprep.subr.mxu0 0.0
      %1871 = vmatpush2.msra.mxu0 0.0
      %1872 = vmatprep.subr.mxu0 0.0
      %1873 = vmatpush2.msra.mxu0 0.0
      %1874 = vmatprep.subr.mxu0 0.0
      %1875 = vmatpush2.msra.mxu0 0.0
      %1876 = vmatprep.subr.mxu0 0.0
      %1877 = vmatpush2.msra.mxu0 0.0
      %1878 = vmatprep.mubr.f32.mxu0 0.0
      %1879 = vmatmul.mubr.f32.gmra.mxu0 %v1732
      %v1880 = vpop.f32.mrf.mxu0
      %v1881 = vadd.f32 0.0, %v1880
      %v1882 = vpop.f32.mrf.mxu0
      %1883 = vdwg.mxu0
      %v1884 = vadd.f32 %v1740, %v1810
      %v1885 = vxor.u32 %v1884, 2147483648
      %v1886 = vmul.f32 %v1885, 1.442695
      %v1887 = vpow.pop %v1886
      %v1888 = vadd.f32 %v1887, 1.0
      %v1889 = vrcp.pop %v1888
      %v1890 = vmul.f32 1.0, %v1889
      %v1891 = vadd.f32 %v1741, %v1812
      %v1892 = vxor.u32 %v1891, 2147483648
      %v1893 = vmul.f32 %v1892, 1.442695
      %v1894 = vpow.pop %v1893
      %v1895 = vadd.f32 %v1894, 1.0
      %v1896 = vrcp.pop %v1895
      %v1897 = vmul.f32 1.0, %v1896
      %v1898 = vadd.f32 %v1881, %v858
      %v1899 = vmul.f32 %v1890, %v1898
      %v1900 = vadd.f32 %v1742, %v1899
      %v1901 = vtanh.pop %v1900
      %v1902 = vsub.f32 1.0, %v1897
      %v1903 = vmul.f32 %v1902, %v1901
      %v1904 = vmul.f32 %v1897, %v1732
      %v1905 = vadd.f32 %v1903, %v1904
      %s1906 = smul.u32 %s1736, 8
      %s1907 = scalar_lea.vmem %s309, %s1906
      %1908 = vst [vmem:[%s1907] sm:$0xff] %v1905
      %s1909 = scalar_select %p691, 7, 0
      %s1910 = smul.u32 %s1909, 3
      %s1911 = smul.addr %s1910, 8
      %s1912 = scalar_lea.vmem [#allocation2], %s1911
      %v1913 = vld [vmem:[%s1912] sm:$0xff]
      %v1914 = vld [vmem:[%s1912 + $0x8] sm:$0xff]
      %v1915 = vld [vmem:[%s1912 + $0x10] sm:$0xff]
      %1916 = vmatprep.subr.mxu0 %v688
      %1917 = vmatpush1.msra.mxu0 %v687
      %1918 = vmatprep.subr.mxu0 %v685
      %1919 = vmatpush1.msra.mxu0 %v684
      %1920 = vmatprep.subr.mxu0 %v682
      %1921 = vmatpush1.msra.mxu0 %v681
      %1922 = vmatprep.subr.mxu0 %v679
      %1923 = vmatpush1.msra.mxu0 %v678
      %1924 = vmatprep.subr.mxu0 %v676
      %1925 = vmatpush1.msra.mxu0 %v675
      %1926 = vmatprep.subr.mxu0 %v673
      %1927 = vmatpush1.msra.mxu0 %v672
      %1928 = vmatprep.subr.mxu0 %v670
      %1929 = vmatpush1.msra.mxu0 %v669
      %1930 = vmatprep.subr.mxu0 %v667
      %1931 = vmatpush1.msra.mxu0 %v666
      %1932 = vmatprep.subr.mxu0 %v664
      %1933 = vmatpush1.msra.mxu0 %v663
      %1934 = vmatprep.subr.mxu0 %v661
      %1935 = vmatpush1.msra.mxu0 %v660
      %1936 = vmatprep.subr.mxu0 %v658
      %1937 = vmatpush1.msra.mxu0 %v657
      %1938 = vmatprep.subr.mxu0 %v655
      %1939 = vmatpush1.msra.mxu0 %v654
      %1940 = vmatprep.subr.mxu0 %v652
      %1941 = vmatpush1.msra.mxu0 %v651
      %1942 = vmatprep.subr.mxu0 %v649
      %1943 = vmatpush1.msra.mxu0 %v648
      %1944 = vmatprep.subr.mxu0 %v646
      %1945 = vmatpush1.msra.mxu0 %v645
      %1946 = vmatprep.subr.mxu0 %v643
      %1947 = vmatpush1.msra.mxu0 %v642
      %1948 = vmatprep.subr.mxu0 0.0
      %1949 = vmatpush2.msra.mxu0 0.0
      %1950 = vmatprep.subr.mxu0 0.0
      %1951 = vmatpush2.msra.mxu0 0.0
      %1952 = vmatprep.subr.mxu0 0.0
      %1953 = vmatpush2.msra.mxu0 0.0
      %1954 = vmatprep.subr.mxu0 0.0
      %1955 = vmatpush2.msra.mxu0 0.0
      %1956 = vmatprep.subr.mxu0 0.0
      %1957 = vmatpush2.msra.mxu0 0.0
      %1958 = vmatprep.subr.mxu0 0.0
      %1959 = vmatpush2.msra.mxu0 0.0
      %1960 = vmatprep.subr.mxu0 0.0
      %1961 = vmatpush2.msra.mxu0 0.0
      %1962 = vmatprep.subr.mxu0 0.0
      %1963 = vmatpush2.msra.mxu0 0.0
      %1964 = vmatprep.subr.mxu0 0.0
      %1965 = vmatpush2.msra.mxu0 0.0
      %1966 = vmatprep.subr.mxu0 0.0
      %1967 = vmatpush2.msra.mxu0 0.0
      %1968 = vmatprep.subr.mxu0 0.0
      %1969 = vmatpush2.msra.mxu0 0.0
      %1970 = vmatprep.subr.mxu0 0.0
      %1971 = vmatpush2.msra.mxu0 0.0
      %1972 = vmatprep.subr.mxu0 0.0
      %1973 = vmatpush2.msra.mxu0 0.0
      %1974 = vmatprep.subr.mxu0 0.0
      %1975 = vmatpush2.msra.mxu0 0.0
      %1976 = vmatprep.subr.mxu0 0.0
      %1977 = vmatpush2.msra.mxu0 0.0
      %1978 = vmatprep.subr.mxu0 0.0
      %1979 = vmatpush2.msra.mxu0 0.0
      %1980 = vmatprep.mubr.f32.mxu0 0.0
      %1981 = vmatmul.mubr.f32.gmra.mxu0 %v1905
      %v1982 = vpop.f32.mrf.mxu0
      %v1983 = vadd.f32 0.0, %v1982
      %v1984 = vpop.f32.mrf.mxu0
      %v1985 = vadd.f32 0.0, %v1984
      %1986 = vdwg.mxu0
      %1987 = vmatprep.subr.mxu0 0.0
      %1988 = vmatpush1.msra.mxu0 %v689
      %1989 = vmatprep.subr.mxu0 0.0
      %1990 = vmatpush1.msra.mxu0 %v686
      %1991 = vmatprep.subr.mxu0 0.0
      %1992 = vmatpush1.msra.mxu0 %v683
      %1993 = vmatprep.subr.mxu0 0.0
      %1994 = vmatpush1.msra.mxu0 %v680
      %1995 = vmatprep.subr.mxu0 0.0
      %1996 = vmatpush1.msra.mxu0 %v677
      %1997 = vmatprep.subr.mxu0 0.0
      %1998 = vmatpush1.msra.mxu0 %v674
      %1999 = vmatprep.subr.mxu0 0.0
      %2000 = vmatpush1.msra.mxu0 %v671
      %2001 = vmatprep.subr.mxu0 0.0
      %2002 = vmatpush1.msra.mxu0 %v668
      %2003 = vmatprep.subr.mxu0 0.0
      %2004 = vmatpush1.msra.mxu0 %v665
      %2005 = vmatprep.subr.mxu0 0.0
      %2006 = vmatpush1.msra.mxu0 %v662
      %2007 = vmatprep.subr.mxu0 0.0
      %2008 = vmatpush1.msra.mxu0 %v659
      %2009 = vmatprep.subr.mxu0 0.0
      %2010 = vmatpush1.msra.mxu0 %v656
      %2011 = vmatprep.subr.mxu0 0.0
      %2012 = vmatpush1.msra.mxu0 %v653
      %2013 = vmatprep.subr.mxu0 0.0
      %2014 = vmatpush1.msra.mxu0 %v650
      %2015 = vmatprep.subr.mxu0 0.0
      %2016 = vmatpush1.msra.mxu0 %v647
      %2017 = vmatprep.subr.mxu0 0.0
      %2018 = vmatpush1.msra.mxu0 %v644
      %2019 = vmatprep.subr.mxu0 0.0
      %2020 = vmatpush2.msra.mxu0 0.0
      %2021 = vmatprep.subr.mxu0 0.0
      %2022 = vmatpush2.msra.mxu0 0.0
      %2023 = vmatprep.subr.mxu0 0.0
      %2024 = vmatpush2.msra.mxu0 0.0
      %2025 = vmatprep.subr.mxu0 0.0
      %2026 = vmatpush2.msra.mxu0 0.0
      %2027 = vmatprep.subr.mxu0 0.0
      %2028 = vmatpush2.msra.mxu0 0.0
      %2029 = vmatprep.subr.mxu0 0.0
      %2030 = vmatpush2.msra.mxu0 0.0
      %2031 = vmatprep.subr.mxu0 0.0
      %2032 = vmatpush2.msra.mxu0 0.0
      %2033 = vmatprep.subr.mxu0 0.0
      %2034 = vmatpush2.msra.mxu0 0.0
      %2035 = vmatprep.subr.mxu0 0.0
      %2036 = vmatpush2.msra.mxu0 0.0
      %2037 = vmatprep.subr.mxu0 0.0
      %2038 = vmatpush2.msra.mxu0 0.0
      %2039 = vmatprep.subr.mxu0 0.0
      %2040 = vmatpush2.msra.mxu0 0.0
      %2041 = vmatprep.subr.mxu0 0.0
      %2042 = vmatpush2.msra.mxu0 0.0
      %2043 = vmatprep.subr.mxu0 0.0
      %2044 = vmatpush2.msra.mxu0 0.0
      %2045 = vmatprep.subr.mxu0 0.0
      %2046 = vmatpush2.msra.mxu0 0.0
      %2047 = vmatprep.subr.mxu0 0.0
      %2048 = vmatpush2.msra.mxu0 0.0
      %2049 = vmatprep.subr.mxu0 0.0
      %2050 = vmatpush2.msra.mxu0 0.0
      %2051 = vmatprep.mubr.f32.mxu0 0.0
      %2052 = vmatmul.mubr.f32.gmra.mxu0 %v1905
      %v2053 = vpop.f32.mrf.mxu0
      %v2054 = vadd.f32 0.0, %v2053
      %v2055 = vpop.f32.mrf.mxu0
      %2056 = vdwg.mxu0
      %v2057 = vadd.f32 %v1913, %v1983
      %v2058 = vxor.u32 %v2057, 2147483648
      %v2059 = vmul.f32 %v2058, 1.442695
      %v2060 = vpow.pop %v2059
      %v2061 = vadd.f32 %v2060, 1.0
      %v2062 = vrcp.pop %v2061
      %v2063 = vmul.f32 1.0, %v2062
      %v2064 = vadd.f32 %v1914, %v1985
      %v2065 = vxor.u32 %v2064, 2147483648
      %v2066 = vmul.f32 %v2065, 1.442695
      %v2067 = vpow.pop %v2066
      %v2068 = vadd.f32 %v2067, 1.0
      %v2069 = vrcp.pop %v2068
      %v2070 = vmul.f32 1.0, %v2069
      %v2071 = vadd.f32 %v2054, %v858
      %v2072 = vmul.f32 %v2063, %v2071
      %v2073 = vadd.f32 %v1915, %v2072
      %v2074 = vtanh.pop %v2073
      %v2075 = vsub.f32 1.0, %v2070
      %v2076 = vmul.f32 %v2075, %v2074
      %v2077 = vmul.f32 %v2070, %v1905
      %v2078 = vadd.f32 %v2076, %v2077
      %s2079 = smul.u32 %s1909, 8
      %s2080 = scalar_lea.vmem %s309, %s2079
      %2081 = vst [vmem:[%s2080] sm:$0xff] %v2078
      %2082 = vst [vmem:[%s313] sm:$0xff] %v2078
      %p2083 = scmp.lt.s32.totalorder %s18, 1
      %s2084 = scalar_select %p2083, %s18, 1
      %s2085 = smul.addr %s2084, 8
      %s2086 = smul.addr %s2085, 8
      %s2087 = scalar_lea.vmem %s5, %s2086
      %p2088 = scmp.lt.s32.totalorder %s18, 1
      %s2089 = scalar_select %p2088, %s18, 1
      %s2090 = smul.addr %s2089, 8
      %s2091 = scalar_lea.vmem %s6, %s2090
      // Predicated region
      $region41: #{encoder_forward.1} parent=39 // pred_check
        %p2092 = pneg %p161
      $region42: #{encoder_forward.1} parent=39 // pred_check_branch
        %2094 = sbr.rel (%p2092) target = $region44
      $region43: #{encoder_forward.1} parent=39 // pred_region
        _
      $region44: #{encoder_forward.1} parent=39 // pred_fallthru
        _
      // Predicated region
      $region45: #{encoder_forward.1} parent=39 // pred_check
        %p2095 = pneg %p187
      $region46: #{encoder_forward.1} parent=39 // pred_check_branch
        %2097 = sbr.rel (%p2095) target = $region48
      $region47: #{encoder_forward.1} parent=39 // pred_region
        _
      $region48: #{encoder_forward.1} parent=39 // pred_fallthru
        _
    $region40: #{encoder_forward.1} parent=5 // pred_fallthru
      _
    %p2098 = scmp.le.s32.totalorder 2, %s13
    // Predicated region
    $region49: #{encoder_forward.1} parent=5 // pred_check
      %p2099 = pneg %p2098
    $region50: #{encoder_forward.1} parent=5 // pred_check_branch
      %2101 = sbr.rel (%p2099) target = $region52
    $region51: #{encoder_forward.1} parent=5 // pred_region
      %s2102 = ssub.s32 %s13, 2
      // Predicated region
      $region53: #{encoder_forward.1} parent=51 // pred_check
        %p2103 = pneg %p167
      $region54: #{encoder_forward.1} parent=51 // pred_check_branch
        %2105 = sbr.rel (%p2103) target = $region56
      $region55: #{encoder_forward.1} parent=51 // pred_region
        %p2106 = scmp.lt.s32.totalorder %s19, 1
        %s2107 = scalar_select %p2106, %s19, 1
        %s2108 = smul.addr %s2107, 8
        %s2109 = smul.addr %s2108, 8
        %s2110 = scalar_lea.vmem %s5, %s2109
      $region56: #{encoder_forward.1} parent=51 // pred_fallthru
        _
      // Predicated region
      $region57: #{encoder_forward.1} parent=51 // pred_check
        %p2111 = pneg %p193
      $region58: #{encoder_forward.1} parent=51 // pred_check_branch
        %2113 = sbr.rel (%p2111) target = $region60
      $region59: #{encoder_forward.1} parent=51 // pred_region
        %p2114 = scmp.lt.s32.totalorder %s19, 1
        %s2115 = scalar_select %p2114, %s19, 1
        %s2116 = smul.addr %s2115, 8
        %s2117 = scalar_lea.vmem %s6, %s2116
      $region60: #{encoder_forward.1} parent=51 // pred_fallthru
        _
    $region52: #{encoder_forward.1} parent=5 // pred_fallthru
      _
  $region6: #{encoder_forward.1} parent=0 // loop_footer
    %s17 = sadd.s32 1, %s13
  $region7: #{encoder_forward.1} parent=0 // loop_footer_branch
    %12 = sbr.rel target = $region3
  $region8: #{encoder_forward.1} parent=0 // loop_exit
    _

</llo_original>
